<compile_context>
chip_gen: v6e
topology: v6e:2x2x1
jax: 0.10.0
libtpu: 0.0.40
codegen_flags: <defaults>
</compile_context>

<pallas_src>
import functools

import jax
import jax.numpy as jnp
from jax.experimental import pallas as pl
from jax.experimental.pallas import tpu as pltpu

LANE = 128


def _full_spec(shape):
    """BlockSpec covering the whole array (resident in VMEM, grid-invariant)."""
    ndim = len(shape)
    return pl.BlockSpec(tuple(shape), lambda *_: (0,) * ndim)


def _vmem_limit_bytes():
    """~80% of this chip's physical VMEM; never below the 48 MiB known-good value."""
    try:
        cap = pltpu.get_tpu_info().vmem_capacity_bytes
        return max(48 * 1024 * 1024, int(cap * 0.8))
    except Exception:
        return 48 * 1024 * 1024


def _make_fused_gnn_kernel(n_layers):
    """Fused n_layers-deep GraphSAGE('mean') forward.

    Ref layout (inputs..., output):
      a_ref : (N, N)      bf16  row-normalized adjacency
      x_ref : (N, D_in)   bf16  input node features
      per layer l: ws_ref (Din_l, Dout_l) bf16, wn_ref (Din_l, Dout_l) bf16,
                   b_ref (1, Dout_l) f32
      o_ref : (N, Dout_pad) f32  lane-dense padded output
    """

    def kernel(a_ref, x_ref, *rest):
        o_ref = rest[3 * n_layers]
        h = x_ref[...]                                   # (N, Din) bf16

        for l in range(n_layers):
            ws_ref = rest[3 * l]
            wn_ref = rest[3 * l + 1]
            b_ref = rest[3 * l + 2]

            # Mean aggregation: A_norm @ H (bf16 x bf16 -> f32 accumulate).
            # Read A from the ref per use (no hoisted full materialized load).
            agg = jnp.dot(a_ref[...], h, preferred_element_type=jnp.float32)

            # Two dots into the same f32 result (no lane concat / stacked K).
            out = (jnp.dot(h, ws_ref[...], preferred_element_type=jnp.float32)
                   + jnp.dot(agg.astype(jnp.bfloat16), wn_ref[...],
                             preferred_element_type=jnp.float32)
                   + b_ref[...])

            if l != n_layers - 1:
                out = jnp.maximum(out, 0.0)              # ReLU
                # TODO(synk): nn.Dropout(0.5) in training mode needs pltpu.prng_*;
                #             identity in eval mode.
                h = out.astype(jnp.bfloat16)
            else:
                o_ref[...] = out.astype(o_ref.dtype)

    return kernel


def prepare_params(params):
    """One-time (init) weight preprocessing, hoisted out of the hot path.

    Casts weights to bf16, keeps W_self/W_neigh UNSTACKED (two-dot form), and
    zero-pads the last layer's Dout to a lane-dense 128-wide slab so the kernel
    issues unmasked vector stores. Padded lanes stay exact zeros.
    Returns (prepped_params, out_dim).
    """
    n_layers = len(params)
    out_dim = params[-1][0].shape[1]
    dout_pad = pl.cdiv(out_dim, LANE) * LANE

    prepped = []
    for l, (w_self, w_neigh, b) in enumerate(params):
        b2 = b.reshape(1, -1).astype(jnp.float32)
        if l == n_layers - 1 and dout_pad != out_dim:
            pad = dout_pad - out_dim
            w_self = jnp.pad(w_self, ((0, 0), (0, pad)))
            w_neigh = jnp.pad(w_neigh, ((0, 0), (0, pad)))
            b2 = jnp.pad(b2, ((0, 0), (0, pad)))
        prepped.append((w_self.astype(jnp.bfloat16),
                        w_neigh.astype(jnp.bfloat16),
                        b2))
    return tuple(prepped), out_dim


@functools.partial(jax.jit, static_argnums=(3,))
def _gnn_forward_impl(a_norm, x, prepped, out_dim):
    n = x.shape[0]
    n_layers = len(prepped)
    dout_pad = prepped[-1][0].shape[1]

    a_bf16 = a_norm.astype(jnp.bfloat16)
    x_bf16 = x.astype(jnp.bfloat16)

    operands = [a_bf16, x_bf16]
    in_specs = [_full_spec(a_bf16.shape), _full_spec(x_bf16.shape)]

    flops = 0
    bytes_accessed = a_bf16.size * 2 + x_bf16.size * 2
    din = x.shape[1]
    for ws, wn, b2 in prepped:
        dout = ws.shape[1]
        operands += [ws, wn, b2]
        in_specs += [_full_spec(ws.shape), _full_spec(wn.shape), _full_spec(b2.shape)]
        flops += 2 * n * n * din + 2 * 2 * n * din * dout
        bytes_accessed += ws.size * 2 + wn.size * 2 + b2.size * 4
        din = dout
    bytes_accessed += n * dout_pad * 4

    out = pl.pallas_call(
        _make_fused_gnn_kernel(n_layers),
        out_shape=jax.ShapeDtypeStruct((n, dout_pad), jnp.float32),
        grid_spec=pltpu.PrefetchScalarGridSpec(
            num_scalar_prefetch=0,
            grid=(1,),
            in_specs=in_specs,
            out_specs=_full_spec((n, dout_pad)),
        ),
        compiler_params=pltpu.CompilerParams(
            dimension_semantics=("arbitrary",),
            vmem_limit_bytes=_vmem_limit_bytes(),
        ),
        cost_estimate=pl.CostEstimate(flops=flops, transcendentals=0,
                                      bytes_accessed=bytes_accessed),
    )(*operands)
    return out[:, :out_dim]


def gnn_forward(a_norm, x, prepped_params, out_dim):
    """Fused GraphSAGE forward (eval mode) on preprocessed params."""
    return _gnn_forward_impl(a_norm, x, prepped_params, out_dim)


def gnn_forward_ref(a_norm, x, params):
    """Pure-JAX f32 reference of the same forward."""
    h = x
    n_layers = len(params)
    for l, (w_self, w_neigh, b) in enumerate(params):
        h = h @ w_self + (a_norm @ h) @ w_neigh + b
        if l != n_layers - 1:
            h = jnp.maximum(h, 0.0)
    return h


if __name__ == "__main__":
    key = jax.random.PRNGKey(0)
    N = 128          # number of graph nodes
    IN, HID, OUT = 32, 32, 16

    k_adj, k_x, *k_w = jax.random.split(key, 2 + 6)

    # Random sparse-ish directed graph -> dense row-normalized adjacency (mean agg).
    adj = (jax.random.uniform(k_adj, (N, N)) < 0.1).astype(jnp.float32)
    deg = jnp.sum(adj, axis=1, keepdims=True)
    a_norm = adj / jnp.maximum(deg, 1.0)   # zero in-degree rows aggregate to 0

    x = jax.random.normal(k_x, (N, IN), dtype=jnp.float32)

    def make_layer(kw, din, dout):
        k1, k2, k3 = jax.random.split(kw, 3)
        scale = 1.0 / jnp.sqrt(jnp.float32(din))
        w_self = jax.random.normal(k1, (din, dout), dtype=jnp.float32) * scale
        w_neigh = jax.random.normal(k2, (din, dout), dtype=jnp.float32) * scale
        b = jax.random.normal(k3, (dout,), dtype=jnp.float32) * 0.01
        return (w_self, w_neigh, b)

    params = [
        make_layer(k_w[0], IN, HID),
        make_layer(k_w[1], HID, HID),
        make_layer(k_w[2], HID, OUT),
    ]

    # Init-time preprocessing (hoisted out of the hot path).
    prepped, out_dim = prepare_params(params)

    out = jax.block_until_ready(gnn_forward(a_norm, x, prepped, out_dim))
    ref = jax.block_until_ready(gnn_forward_ref(a_norm, x, params))

    assert out.shape == (N, OUT), out.shape
    # Kernel feeds the MXU bf16 inputs (f32 accumulation); compare against the
    # exact f32 reference with a bf16-appropriate tolerance.
    assert jnp.allclose(out, ref, atol=5e-2, rtol=5e-2), "mismatch vs reference"
    print("KERNEL_OK")
</pallas_src>

<mosaic_0001>
module attributes {stable_mosaic.version = 11 : i64} {
  func.func @kernel(%arg0: i32, %arg1: memref<128x128xbf16, #tpu.memory_space<vmem>>, %arg2: memref<128x32xbf16, #tpu.memory_space<vmem>>, %arg3: memref<32x32xbf16, #tpu.memory_space<vmem>>, %arg4: memref<32x32xbf16, #tpu.memory_space<vmem>>, %arg5: memref<1x32xf32, #tpu.memory_space<vmem>>, %arg6: memref<32x32xbf16, #tpu.memory_space<vmem>>, %arg7: memref<32x32xbf16, #tpu.memory_space<vmem>>, %arg8: memref<1x32xf32, #tpu.memory_space<vmem>>, %arg9: memref<32x128xbf16, #tpu.memory_space<vmem>>, %arg10: memref<32x128xbf16, #tpu.memory_space<vmem>>, %arg11: memref<1x128xf32, #tpu.memory_space<vmem>>, %arg12: memref<128x128xf32, #tpu.memory_space<vmem>>) attributes {dimension_semantics = [#tpu.dimension_semantics<arbitrary>], iteration_bounds = array<i64: 1>, scalar_prefetch = 0 : i64, scratch_operands = 0 : i64, tpu.core_type = #tpu.core_type<tc>, window_params = [{pipeline_mode = #tpu.pipeline_mode<synchronous>, transform_indices = @transform_0, window_bounds = array<i64: 128, 128>}, {pipeline_mode = #tpu.pipeline_mode<synchronous>, transform_indices = @transform_1, window_bounds = array<i64: 128, 32>}, {pipeline_mode = #tpu.pipeline_mode<synchronous>, transform_indices = @transform_2, window_bounds = array<i64: 32, 32>}, {pipeline_mode = #tpu.pipeline_mode<synchronous>, transform_indices = @transform_3, window_bounds = array<i64: 32, 32>}, {pipeline_mode = #tpu.pipeline_mode<synchronous>, transform_indices = @transform_4, window_bounds = array<i64: 1, 32>}, {pipeline_mode = #tpu.pipeline_mode<synchronous>, transform_indices = @transform_5, window_bounds = array<i64: 32, 32>}, {pipeline_mode = #tpu.pipeline_mode<synchronous>, transform_indices = @transform_6, window_bounds = array<i64: 32, 32>}, {pipeline_mode = #tpu.pipeline_mode<synchronous>, transform_indices = @transform_7, window_bounds = array<i64: 1, 32>}, {pipeline_mode = #tpu.pipeline_mode<synchronous>, transform_indices = @transform_8, window_bounds = array<i64: 32, 128>}, {pipeline_mode = #tpu.pipeline_mode<synchronous>, transform_indices = @transform_9, window_bounds = array<i64: 32, 128>}, {pipeline_mode = #tpu.pipeline_mode<synchronous>, transform_indices = @transform_10, window_bounds = array<i64: 1, 128>}, {pipeline_mode = #tpu.pipeline_mode<synchronous>, transform_indices = @transform_11, window_bounds = array<i64: 128, 128>}]} {
    %c0 = arith.constant 0 : index
    %c0_0 = arith.constant 0 : index
    %0 = vector.load %arg2[%c0, %c0_0] : memref<128x32xbf16, #tpu.memory_space<vmem>>, vector<128x32xbf16>
    %c0_1 = arith.constant 0 : index
    %c0_2 = arith.constant 0 : index
    %1 = vector.load %arg1[%c0_1, %c0_2] : memref<128x128xbf16, #tpu.memory_space<vmem>>, vector<128x128xbf16>
    %cst = arith.constant dense<0.000000e+00> : vector<128x32xf32>
    %2 = tpu.matmul %1, %0, %cst {dimension_numbers = #tpu.dot_dimension_numbers<[1], [0], [0], [1], [0, 0, 1, 1], [], []>} : vector<128x128xbf16>, vector<128x32xbf16>, vector<128x32xf32> -> vector<128x32xf32>
    %c0_3 = arith.constant 0 : index
    %c0_4 = arith.constant 0 : index
    %3 = vector.load %arg3[%c0_3, %c0_4] : memref<32x32xbf16, #tpu.memory_space<vmem>>, vector<32x32xbf16>
    %cst_5 = arith.constant dense<0.000000e+00> : vector<128x32xf32>
    %4 = tpu.matmul %0, %3, %cst_5 {dimension_numbers = #tpu.dot_dimension_numbers<[1], [0], [0], [1], [0, 0, 1, 1], [], []>} : vector<128x32xbf16>, vector<32x32xbf16>, vector<128x32xf32> -> vector<128x32xf32>
    %5 = arith.truncf %2 : vector<128x32xf32> to vector<128x32xbf16>
    %c0_6 = arith.constant 0 : index
    %c0_7 = arith.constant 0 : index
    %6 = vector.load %arg4[%c0_6, %c0_7] : memref<32x32xbf16, #tpu.memory_space<vmem>>, vector<32x32xbf16>
    %cst_8 = arith.constant dense<0.000000e+00> : vector<128x32xf32>
    %7 = tpu.matmul %5, %6, %cst_8 {dimension_numbers = #tpu.dot_dimension_numbers<[1], [0], [0], [1], [0, 0, 1, 1], [], []>} : vector<128x32xbf16>, vector<32x32xbf16>, vector<128x32xf32> -> vector<128x32xf32>
    %8 = arith.addf %4, %7 : vector<128x32xf32>
    %c0_9 = arith.constant 0 : index
    %c0_10 = arith.constant 0 : index
    %9 = vector.load %arg5[%c0_9, %c0_10] : memref<1x32xf32, #tpu.memory_space<vmem>>, vector<1x32xf32>
    %10 = vector.broadcast %9 : vector<1x32xf32> to vector<128x32xf32>
    %11 = arith.addf %8, %10 : vector<128x32xf32>
    %cst_11 = arith.constant 0.000000e+00 : f32
    %12 = vector.broadcast %cst_11 : f32 to vector<128x32xf32>
    %13 = arith.maximumf %11, %12 : vector<128x32xf32>
    %14 = arith.truncf %13 : vector<128x32xf32> to vector<128x32xbf16>
    %c0_12 = arith.constant 0 : index
    %c0_13 = arith.constant 0 : index
    %15 = vector.load %arg1[%c0_12, %c0_13] : memref<128x128xbf16, #tpu.memory_space<vmem>>, vector<128x128xbf16>
    %cst_14 = arith.constant dense<0.000000e+00> : vector<128x32xf32>
    %16 = tpu.matmul %15, %14, %cst_14 {dimension_numbers = #tpu.dot_dimension_numbers<[1], [0], [0], [1], [0, 0, 1, 1], [], []>} : vector<128x128xbf16>, vector<128x32xbf16>, vector<128x32xf32> -> vector<128x32xf32>
    %c0_15 = arith.constant 0 : index
    %c0_16 = arith.constant 0 : index
    %17 = vector.load %arg6[%c0_15, %c0_16] : memref<32x32xbf16, #tpu.memory_space<vmem>>, vector<32x32xbf16>
    %cst_17 = arith.constant dense<0.000000e+00> : vector<128x32xf32>
    %18 = tpu.matmul %14, %17, %cst_17 {dimension_numbers = #tpu.dot_dimension_numbers<[1], [0], [0], [1], [0, 0, 1, 1], [], []>} : vector<128x32xbf16>, vector<32x32xbf16>, vector<128x32xf32> -> vector<128x32xf32>
    %19 = arith.truncf %16 : vector<128x32xf32> to vector<128x32xbf16>
    %c0_18 = arith.constant 0 : index
    %c0_19 = arith.constant 0 : index
    %20 = vector.load %arg7[%c0_18, %c0_19] : memref<32x32xbf16, #tpu.memory_space<vmem>>, vector<32x32xbf16>
    %cst_20 = arith.constant dense<0.000000e+00> : vector<128x32xf32>
    %21 = tpu.matmul %19, %20, %cst_20 {dimension_numbers = #tpu.dot_dimension_numbers<[1], [0], [0], [1], [0, 0, 1, 1], [], []>} : vector<128x32xbf16>, vector<32x32xbf16>, vector<128x32xf32> -> vector<128x32xf32>
    %22 = arith.addf %18, %21 : vector<128x32xf32>
    %c0_21 = arith.constant 0 : index
    %c0_22 = arith.constant 0 : index
    %23 = vector.load %arg8[%c0_21, %c0_22] : memref<1x32xf32, #tpu.memory_space<vmem>>, vector<1x32xf32>
    %24 = vector.broadcast %23 : vector<1x32xf32> to vector<128x32xf32>
    %25 = arith.addf %22, %24 : vector<128x32xf32>
    %cst_23 = arith.constant 0.000000e+00 : f32
    %26 = vector.broadcast %cst_23 : f32 to vector<128x32xf32>
    %27 = arith.maximumf %25, %26 : vector<128x32xf32>
    %28 = arith.truncf %27 : vector<128x32xf32> to vector<128x32xbf16>
    %c0_24 = arith.constant 0 : index
    %c0_25 = arith.constant 0 : index
    %29 = vector.load %arg1[%c0_24, %c0_25] : memref<128x128xbf16, #tpu.memory_space<vmem>>, vector<128x128xbf16>
    %cst_26 = arith.constant dense<0.000000e+00> : vector<128x32xf32>
    %30 = tpu.matmul %29, %28, %cst_26 {dimension_numbers = #tpu.dot_dimension_numbers<[1], [0], [0], [1], [0, 0, 1, 1], [], []>} : vector<128x128xbf16>, vector<128x32xbf16>, vector<128x32xf32> -> vector<128x32xf32>
    %c0_27 = arith.constant 0 : index
    %c0_28 = arith.constant 0 : index
    %31 = vector.load %arg9[%c0_27, %c0_28] : memref<32x128xbf16, #tpu.memory_space<vmem>>, vector<32x128xbf16>
    %cst_29 = arith.constant dense<0.000000e+00> : vector<128x128xf32>
    %32 = tpu.matmul %28, %31, %cst_29 {dimension_numbers = #tpu.dot_dimension_numbers<[1], [0], [0], [1], [0, 0, 1, 1], [], []>} : vector<128x32xbf16>, vector<32x128xbf16>, vector<128x128xf32> -> vector<128x128xf32>
    %33 = arith.truncf %30 : vector<128x32xf32> to vector<128x32xbf16>
    %c0_30 = arith.constant 0 : index
    %c0_31 = arith.constant 0 : index
    %34 = vector.load %arg10[%c0_30, %c0_31] : memref<32x128xbf16, #tpu.memory_space<vmem>>, vector<32x128xbf16>
    %cst_32 = arith.constant dense<0.000000e+00> : vector<128x128xf32>
    %35 = tpu.matmul %33, %34, %cst_32 {dimension_numbers = #tpu.dot_dimension_numbers<[1], [0], [0], [1], [0, 0, 1, 1], [], []>} : vector<128x32xbf16>, vector<32x128xbf16>, vector<128x128xf32> -> vector<128x128xf32>
    %36 = arith.addf %32, %35 : vector<128x128xf32>
    %c0_33 = arith.constant 0 : index
    %c0_34 = arith.constant 0 : index
    %37 = vector.load %arg11[%c0_33, %c0_34] : memref<1x128xf32, #tpu.memory_space<vmem>>, vector<1x128xf32>
    %38 = vector.broadcast %37 : vector<1x128xf32> to vector<128x128xf32>
    %39 = arith.addf %36, %38 : vector<128x128xf32>
    %c0_35 = arith.constant 0 : index
    %c0_36 = arith.constant 0 : index
    %40 = vector.load %arg12[%c0_35, %c0_36] : memref<128x128xf32, #tpu.memory_space<vmem>>, vector<128x128xf32>
    tpu.vector_store %arg12[%c0_35, %c0_36], %39 {strides = array<i32>} : memref<128x128xf32, #tpu.memory_space<vmem>>, vector<128x128xf32>,
    return
  }
  func.func @transform_0(%arg0: i32) -> (i32, i32) {
    %c0_i32 = arith.constant 0 : i32
    %c0_i32_0 = arith.constant 0 : i32
    %c0_i32_1 = arith.constant 0 : i32
    return %c0_i32, %c0_i32_0 : i32, i32
  }
  func.func @transform_1(%arg0: i32) -> (i32, i32) {
    %c0_i32 = arith.constant 0 : i32
    %c0_i32_0 = arith.constant 0 : i32
    %c0_i32_1 = arith.constant 0 : i32
    return %c0_i32, %c0_i32_0 : i32, i32
  }
  func.func @transform_2(%arg0: i32) -> (i32, i32) {
    %c0_i32 = arith.constant 0 : i32
    %c0_i32_0 = arith.constant 0 : i32
    %c0_i32_1 = arith.constant 0 : i32
    return %c0_i32, %c0_i32_0 : i32, i32
  }
  func.func @transform_3(%arg0: i32) -> (i32, i32) {
    %c0_i32 = arith.constant 0 : i32
    %c0_i32_0 = arith.constant 0 : i32
    %c0_i32_1 = arith.constant 0 : i32
    return %c0_i32, %c0_i32_0 : i32, i32
  }
  func.func @transform_4(%arg0: i32) -> (i32, i32) {
    %c0_i32 = arith.constant 0 : i32
    %c0_i32_0 = arith.constant 0 : i32
    %c0_i32_1 = arith.constant 0 : i32
    return %c0_i32, %c0_i32_0 : i32, i32
  }
  func.func @transform_5(%arg0: i32) -> (i32, i32) {
    %c0_i32 = arith.constant 0 : i32
    %c0_i32_0 = arith.constant 0 : i32
    %c0_i32_1 = arith.constant 0 : i32
    return %c0_i32, %c0_i32_0 : i32, i32
  }
  func.func @transform_6(%arg0: i32) -> (i32, i32) {
    %c0_i32 = arith.constant 0 : i32
    %c0_i32_0 = arith.constant 0 : i32
    %c0_i32_1 = arith.constant 0 : i32
    return %c0_i32, %c0_i32_0 : i32, i32
  }
  func.func @transform_7(%arg0: i32) -> (i32, i32) {
    %c0_i32 = arith.constant 0 : i32
    %c0_i32_0 = arith.constant 0 : i32
    %c0_i32_1 = arith.constant 0 : i32
    return %c0_i32, %c0_i32_0 : i32, i32
  }
  func.func @transform_8(%arg0: i32) -> (i32, i32) {
    %c0_i32 = arith.constant 0 : i32
    %c0_i32_0 = arith.constant 0 : i32
    %c0_i32_1 = arith.constant 0 : i32
    return %c0_i32, %c0_i32_0 : i32, i32
  }
  func.func @transform_9(%arg0: i32) -> (i32, i32) {
    %c0_i32 = arith.constant 0 : i32
    %c0_i32_0 = arith.constant 0 : i32
    %c0_i32_1 = arith.constant 0 : i32
    return %c0_i32, %c0_i32_0 : i32, i32
  }
  func.func @transform_10(%arg0: i32) -> (i32, i32) {
    %c0_i32 = arith.constant 0 : i32
    %c0_i32_0 = arith.constant 0 : i32
    %c0_i32_1 = arith.constant 0 : i32
    return %c0_i32, %c0_i32_0 : i32, i32
  }
  func.func @transform_11(%arg0: i32) -> (i32, i32) {
    %c0_i32 = arith.constant 0 : i32
    %c0_i32_0 = arith.constant 0 : i32
    %c0_i32_1 = arith.constant 0 : i32
    return %c0_i32, %c0_i32_0 : i32, i32
  }
}

</mosaic_0001>

<llo_original>
// kernel: _gnn_forward_impl.1
$region0: #{_gnn_forward_impl.1}
  #allocation0 [shape = 'u32[]', space=smem, size = 0x4, offset = 0x4, fixed_abs, tag = 'smem constant byte address 0x4 - core index']
  #allocation1 [shape = 'u32[144,128]{1,0:T(1,128)}', space=vmem, size = 0x12000, scoped, tag = 'internal scratch']
  %s0 = inlined_call_operand.vmem [shape: bf16[128,128], index: 0, kind: input, shape index: {}]
  %s1 = inlined_call_operand.vmem [shape: bf16[128,32], index: 1, kind: input, shape index: {}]
  %s2 = inlined_call_operand.vmem [shape: bf16[32,32], index: 2, kind: input, shape index: {}]
  %s3 = inlined_call_operand.vmem [shape: bf16[32,32], index: 3, kind: input, shape index: {}]
  %s4 = inlined_call_operand.vmem [shape: f32[1,32], index: 4, kind: input, shape index: {}]
  %s5 = inlined_call_operand.vmem [shape: bf16[32,32], index: 5, kind: input, shape index: {}]
  %s6 = inlined_call_operand.vmem [shape: bf16[32,32], index: 6, kind: input, shape index: {}]
  %s7 = inlined_call_operand.vmem [shape: f32[1,32], index: 7, kind: input, shape index: {}]
  %s8 = inlined_call_operand.vmem [shape: bf16[32,128], index: 8, kind: input, shape index: {}]
  %s9 = inlined_call_operand.vmem [shape: bf16[32,128], index: 9, kind: input, shape index: {}]
  %s10 = inlined_call_operand.vmem [shape: f32[1,128], index: 10, kind: input, shape index: {}]
  %s11 = inlined_call_operand.vmem [shape: f32[128,128], index: 11, kind: output, shape index: {}]
  %s12 = sld [smem:[#allocation0]]
  $region54: #{_gnn_forward_impl.1} parent=0
    _
  %s14 = ssub.s32 1, %s12
  %s15 = scalar_select 0, %s14, %s12
  // Predicated region
  $region2: #{_gnn_forward_impl.1} parent=0 // pred_check
    _
  $region3: #{_gnn_forward_impl.1} parent=0 // pred_check_branch
    %17 = sbr.rel (0) target = $region5
  $region4: #{_gnn_forward_impl.1} parent=0 // pred_region
    _
  $region5: #{_gnn_forward_impl.1} parent=0 // pred_fallthru
    _
  // Predicated region
  $region6: #{_gnn_forward_impl.1} parent=0 // pred_check
    _
  $region7: #{_gnn_forward_impl.1} parent=0 // pred_check_branch
    %19 = sbr.rel (0) target = $region9
  $region8: #{_gnn_forward_impl.1} parent=0 // pred_region
    _
  $region9: #{_gnn_forward_impl.1} parent=0 // pred_fallthru
    _
  // Predicated region
  $region10: #{_gnn_forward_impl.1} parent=0 // pred_check
    _
  $region11: #{_gnn_forward_impl.1} parent=0 // pred_check_branch
    %21 = sbr.rel (0) target = $region13
  $region12: #{_gnn_forward_impl.1} parent=0 // pred_region
    _
  $region13: #{_gnn_forward_impl.1} parent=0 // pred_fallthru
    _
  // Predicated region
  $region14: #{_gnn_forward_impl.1} parent=0 // pred_check
    _
  $region15: #{_gnn_forward_impl.1} parent=0 // pred_check_branch
    %23 = sbr.rel (0) target = $region17
  $region16: #{_gnn_forward_impl.1} parent=0 // pred_region
    _
  $region17: #{_gnn_forward_impl.1} parent=0 // pred_fallthru
    _
  // Predicated region
  $region18: #{_gnn_forward_impl.1} parent=0 // pred_check
    _
  $region19: #{_gnn_forward_impl.1} parent=0 // pred_check_branch
    %25 = sbr.rel (0) target = $region21
  $region20: #{_gnn_forward_impl.1} parent=0 // pred_region
    _
  $region21: #{_gnn_forward_impl.1} parent=0 // pred_fallthru
    _
  // Predicated region
  $region22: #{_gnn_forward_impl.1} parent=0 // pred_check
    _
  $region23: #{_gnn_forward_impl.1} parent=0 // pred_check_branch
    %27 = sbr.rel (0) target = $region25
  $region24: #{_gnn_forward_impl.1} parent=0 // pred_region
    _
  $region25: #{_gnn_forward_impl.1} parent=0 // pred_fallthru
    _
  // Predicated region
  $region26: #{_gnn_forward_impl.1} parent=0 // pred_check
    _
  $region27: #{_gnn_forward_impl.1} parent=0 // pred_check_branch
    %29 = sbr.rel (0) target = $region29
  $region28: #{_gnn_forward_impl.1} parent=0 // pred_region
    _
  $region29: #{_gnn_forward_impl.1} parent=0 // pred_fallthru
    _
  // Predicated region
  $region30: #{_gnn_forward_impl.1} parent=0 // pred_check
    _
  $region31: #{_gnn_forward_impl.1} parent=0 // pred_check_branch
    %31 = sbr.rel (0) target = $region33
  $region32: #{_gnn_forward_impl.1} parent=0 // pred_region
    _
  $region33: #{_gnn_forward_impl.1} parent=0 // pred_fallthru
    _
  // Predicated region
  $region34: #{_gnn_forward_impl.1} parent=0 // pred_check
    _
  $region35: #{_gnn_forward_impl.1} parent=0 // pred_check_branch
    %33 = sbr.rel (0) target = $region37
  $region36: #{_gnn_forward_impl.1} parent=0 // pred_region
    _
  $region37: #{_gnn_forward_impl.1} parent=0 // pred_fallthru
    _
  // Predicated region
  $region38: #{_gnn_forward_impl.1} parent=0 // pred_check
    _
  $region39: #{_gnn_forward_impl.1} parent=0 // pred_check_branch
    %35 = sbr.rel (0) target = $region41
  $region40: #{_gnn_forward_impl.1} parent=0 // pred_region
    _
  $region41: #{_gnn_forward_impl.1} parent=0 // pred_fallthru
    _
  // Predicated region
  $region42: #{_gnn_forward_impl.1} parent=0 // pred_check
    _
  $region43: #{_gnn_forward_impl.1} parent=0 // pred_check_branch
    %37 = sbr.rel (0) target = $region45
  $region44: #{_gnn_forward_impl.1} parent=0 // pred_region
    _
  $region45: #{_gnn_forward_impl.1} parent=0 // pred_fallthru
    _
  %v39 = vld [vmem:[%s1] sm:$0xf]
  %v40 = vld [vmem:[%s1 + $0x4] sm:$0xf]
  %v41 = vld [vmem:[%s1 + $0x8] sm:$0xf]
  %v42 = vld [vmem:[%s1 + $0xc] sm:$0xf]
  %v43 = vld [vmem:[%s1 + $0x10] sm:$0xf]
  %v44 = vld [vmem:[%s1 + $0x14] sm:$0xf]
  %v45 = vld [vmem:[%s1 + $0x18] sm:$0xf]
  %v46 = vld [vmem:[%s1 + $0x1c] sm:$0xf]
  %v47 = vld [vmem:[%s1 + $0x20] sm:$0xf]
  %v48 = vld [vmem:[%s1 + $0x24] sm:$0xf]
  %v49 = vld [vmem:[%s1 + $0x28] sm:$0xf]
  %v50 = vld [vmem:[%s1 + $0x2c] sm:$0xf]
  %v51 = vld [vmem:[%s1 + $0x30] sm:$0xf]
  %v52 = vld [vmem:[%s1 + $0x34] sm:$0xf]
  %v53 = vld [vmem:[%s1 + $0x38] sm:$0xf]
  %v54 = vld [vmem:[%s1 + $0x3c] sm:$0xf]
  %v55 = vld [vmem:[%s0] sm:$0xf]
  %v56 = vld [vmem:[%s0 + $0x4] sm:$0xf]
  %v57 = vld [vmem:[%s0 + $0x8] sm:$0xf]
  %v58 = vld [vmem:[%s0 + $0xc] sm:$0xf]
  %v59 = vld [vmem:[%s0 + $0x10] sm:$0xf]
  %v60 = vld [vmem:[%s0 + $0x14] sm:$0xf]
  %v61 = vld [vmem:[%s0 + $0x18] sm:$0xf]
  %v62 = vld [vmem:[%s0 + $0x1c] sm:$0xf]
  %v63 = vld [vmem:[%s0 + $0x20] sm:$0xf]
  %v64 = vld [vmem:[%s0 + $0x24] sm:$0xf]
  %v65 = vld [vmem:[%s0 + $0x28] sm:$0xf]
  %v66 = vld [vmem:[%s0 + $0x2c] sm:$0xf]
  %v67 = vld [vmem:[%s0 + $0x30] sm:$0xf]
  %v68 = vld [vmem:[%s0 + $0x34] sm:$0xf]
  %v69 = vld [vmem:[%s0 + $0x38] sm:$0xf]
  %v70 = vld [vmem:[%s0 + $0x3c] sm:$0xf]
  %v87 = vunpack.c.l.b16 %v55
  %v88 = vunpack.c.l.b16 %v56
  %v89 = vunpack.c.l.b16 %v57
  %v90 = vunpack.c.l.b16 %v58
  %v91 = vunpack.c.l.b16 %v59
  %v92 = vunpack.c.l.b16 %v60
  %v93 = vunpack.c.l.b16 %v61
  %v94 = vunpack.c.l.b16 %v62
  %v95 = vunpack.c.l.b16 %v63
  %v96 = vunpack.c.l.b16 %v64
  %v97 = vunpack.c.l.b16 %v65
  %v98 = vunpack.c.l.b16 %v66
  %v99 = vunpack.c.l.b16 %v67
  %v100 = vunpack.c.l.b16 %v68
  %v101 = vunpack.c.l.b16 %v69
  %v102 = vunpack.c.l.b16 %v70
  %v103 = vpack.c.b16 %v88, %v87
  %v104 = vpack.c.b16 %v90, %v89
  %v105 = vpack.c.b16 %v92, %v91
  %v106 = vpack.c.b16 %v94, %v93
  %v107 = vpack.c.b16 %v96, %v95
  %v108 = vpack.c.b16 %v98, %v97
  %v109 = vpack.c.b16 %v100, %v99
  %v110 = vpack.c.b16 %v102, %v101
  %v135 = vunpack.c.l.b16 %v39
  %v136 = vunpack.c.l.b16 %v40
  %v137 = vunpack.c.l.b16 %v41
  %v138 = vunpack.c.l.b16 %v42
  %v139 = vunpack.c.l.b16 %v43
  %v140 = vunpack.c.l.b16 %v44
  %v141 = vunpack.c.l.b16 %v45
  %v142 = vunpack.c.l.b16 %v46
  %v143 = vunpack.c.l.b16 %v47
  %v144 = vunpack.c.l.b16 %v48
  %v145 = vunpack.c.l.b16 %v49
  %v146 = vunpack.c.l.b16 %v50
  %v147 = vunpack.c.l.b16 %v51
  %v148 = vunpack.c.l.b16 %v52
  %v149 = vunpack.c.l.b16 %v53
  %v150 = vunpack.c.l.b16 %v54
  %v151 = vpack.c.b16 %v136, %v135
  %v152 = vpack.c.b16 %v138, %v137
  %v153 = vpack.c.b16 %v140, %v139
  %v154 = vpack.c.b16 %v142, %v141
  %v155 = vpack.c.b16 %v144, %v143
  %v156 = vpack.c.b16 %v146, %v145
  %v157 = vpack.c.b16 %v148, %v147
  %v158 = vpack.c.b16 %v150, %v149
  %167 = vmatprep.subr.bf16.mxu0 0
  %168 = vmatpush1.bf16.msra.mxu0 %v158
  %169 = vmatprep.subr.bf16.mxu0 0
  %170 = vmatpush1.bf16.msra.mxu0 %v157
  %171 = vmatprep.subr.bf16.mxu0 0
  %172 = vmatpush1.bf16.msra.mxu0 %v156
  %173 = vmatprep.subr.bf16.mxu0 0
  %174 = vmatpush1.bf16.msra.mxu0 %v155
  %175 = vmatprep.subr.bf16.mxu0 0
  %176 = vmatpush1.bf16.msra.mxu0 %v154
  %177 = vmatprep.subr.bf16.mxu0 0
  %178 = vmatpush1.bf16.msra.mxu0 %v153
  %179 = vmatprep.subr.bf16.mxu0 0
  %180 = vmatpush1.bf16.msra.mxu0 %v152
  %181 = vmatprep.subr.bf16.mxu0 0
  %182 = vmatpush1.bf16.msra.mxu0 %v151
  %183 = vmatprep.subr.bf16.mxu0 0
  %184 = vmatpush2.bf16.msra.mxu0 0
  %185 = vmatprep.subr.bf16.mxu0 0
  %186 = vmatpush2.bf16.msra.mxu0 0
  %187 = vmatprep.subr.bf16.mxu0 0
  %188 = vmatpush2.bf16.msra.mxu0 0
  %189 = vmatprep.subr.bf16.mxu0 0
  %190 = vmatpush2.bf16.msra.mxu0 0
  %191 = vmatprep.subr.bf16.mxu0 0
  %192 = vmatpush2.bf16.msra.mxu0 0
  %193 = vmatprep.subr.bf16.mxu0 0
  %194 = vmatpush2.bf16.msra.mxu0 0
  %195 = vmatprep.subr.bf16.mxu0 0
  %196 = vmatpush2.bf16.msra.mxu0 0
  %197 = vmatprep.subr.bf16.mxu0 0
  %198 = vmatpush2.bf16.msra.mxu0 0
  %199 = vmatprep.mubr.bf16.mxu0 0
  %200 = vmatmul.mubr.bf16.gmra.mxu0 %v103
  %v201 = vpop.f32.mrf.mxu0
  %v202 = vadd.f32 0.0, %v201
  %v203 = vpop.f32.mrf.mxu0
  %v204 = vpop.f32.mrf.mxu0
  %v205 = vadd.f32 0.0, %v204
  %v206 = vpop.f32.mrf.mxu0
  %207 = vmatprep.mubr.bf16.mxu0 0
  %208 = vmatmul.mubr.bf16.gmra.mxu0 %v104
  %v209 = vpop.f32.mrf.mxu0
  %v210 = vadd.f32 0.0, %v209
  %v211 = vpop.f32.mrf.mxu0
  %v212 = vpop.f32.mrf.mxu0
  %v213 = vadd.f32 0.0, %v212
  %v214 = vpop.f32.mrf.mxu0
  %215 = vmatprep.mubr.bf16.mxu0 0
  %216 = vmatmul.mubr.bf16.gmra.mxu0 %v105
  %v217 = vpop.f32.mrf.mxu0
  %v218 = vadd.f32 0.0, %v217
  %v219 = vpop.f32.mrf.mxu0
  %v220 = vpop.f32.mrf.mxu0
  %v221 = vadd.f32 0.0, %v220
  %v222 = vpop.f32.mrf.mxu0
  %223 = vmatprep.mubr.bf16.mxu0 0
  %224 = vmatmul.mubr.bf16.gmra.mxu0 %v106
  %v225 = vpop.f32.mrf.mxu0
  %v226 = vadd.f32 0.0, %v225
  %v227 = vpop.f32.mrf.mxu0
  %v228 = vpop.f32.mrf.mxu0
  %v229 = vadd.f32 0.0, %v228
  %v230 = vpop.f32.mrf.mxu0
  %231 = vmatprep.mubr.bf16.mxu0 0
  %232 = vmatmul.mubr.bf16.gmra.mxu0 %v107
  %v233 = vpop.f32.mrf.mxu0
  %v234 = vadd.f32 0.0, %v233
  %v235 = vpop.f32.mrf.mxu0
  %v236 = vpop.f32.mrf.mxu0
  %v237 = vadd.f32 0.0, %v236
  %v238 = vpop.f32.mrf.mxu0
  %239 = vmatprep.mubr.bf16.mxu0 0
  %240 = vmatmul.mubr.bf16.gmra.mxu0 %v108
  %v241 = vpop.f32.mrf.mxu0
  %v242 = vadd.f32 0.0, %v241
  %v243 = vpop.f32.mrf.mxu0
  %v244 = vpop.f32.mrf.mxu0
  %v245 = vadd.f32 0.0, %v244
  %v246 = vpop.f32.mrf.mxu0
  %247 = vmatprep.mubr.bf16.mxu0 0
  %248 = vmatmul.mubr.bf16.gmra.mxu0 %v109
  %v249 = vpop.f32.mrf.mxu0
  %v250 = vadd.f32 0.0, %v249
  %v251 = vpop.f32.mrf.mxu0
  %v252 = vpop.f32.mrf.mxu0
  %v253 = vadd.f32 0.0, %v252
  %v254 = vpop.f32.mrf.mxu0
  %255 = vmatprep.mubr.bf16.mxu0 0
  %256 = vmatmul.mubr.bf16.gmra.mxu0 %v110
  %v257 = vpop.f32.mrf.mxu0
  %v258 = vadd.f32 0.0, %v257
  %v259 = vpop.f32.mrf.mxu0
  %v260 = vpop.f32.mrf.mxu0
  %v261 = vadd.f32 0.0, %v260
  %v262 = vpop.f32.mrf.mxu0
  %263 = vdwg.mxu0
  %v264 = vld [vmem:[%s2] sm:$0xf]
  %v265 = vld [vmem:[%s2 + $0x4] sm:$0xf]
  %v266 = vld [vmem:[%s2 + $0x8] sm:$0xf]
  %v267 = vld [vmem:[%s2 + $0xc] sm:$0xf]
  %v268 = vpack.c.bf16 %v205, %v202
  %v269 = vpack.c.bf16 %v213, %v210
  %v270 = vpack.c.bf16 %v221, %v218
  %v271 = vpack.c.bf16 %v229, %v226
  %v272 = vpack.c.bf16 %v237, %v234
  %v273 = vpack.c.bf16 %v245, %v242
  %v274 = vpack.c.bf16 %v253, %v250
  %v275 = vpack.c.bf16 %v261, %v258
  %v276 = vld [vmem:[%s3] sm:$0xf]
  %v277 = vld [vmem:[%s3 + $0x4] sm:$0xf]
  %v278 = vld [vmem:[%s3 + $0x8] sm:$0xf]
  %v279 = vld [vmem:[%s3 + $0xc] sm:$0xf]
  %v284 = vunpack.c.l.b16 %v276
  %v285 = vunpack.c.l.b16 %v277
  %v286 = vunpack.c.l.b16 %v278
  %v287 = vunpack.c.l.b16 %v279
  %v288 = vpack.c.b16 %v285, %v284
  %v289 = vpack.c.b16 %v287, %v286
  %vm292 = vcmask 261120
  %v294 = vsel %vm292, %v268, 0
  %v297 = vsel %vm292, %v269, 0
  %v300 = vsel %vm292, %v270, 0
  %v303 = vsel %vm292, %v271, 0
  %v306 = vsel %vm292, %v272, 0
  %v309 = vsel %vm292, %v273, 0
  %v312 = vsel %vm292, %v274, 0
  %v315 = vsel %vm292, %v275, 0
  %317 = vmatprep.subr.bf16.mxu0 0
  %318 = vmatpush1.bf16.msra.mxu0 0
  %319 = vmatprep.subr.bf16.mxu0 0
  %320 = vmatpush1.bf16.msra.mxu0 0
  %321 = vmatprep.subr.bf16.mxu0 0
  %322 = vmatpush1.bf16.msra.mxu0 0
  %323 = vmatprep.subr.bf16.mxu0 0
  %324 = vmatpush1.bf16.msra.mxu0 0
  %325 = vmatprep.subr.bf16.mxu0 0
  %326 = vmatpush1.bf16.msra.mxu0 0
  %327 = vmatprep.subr.bf16.mxu0 0
  %328 = vmatpush1.bf16.msra.mxu0 0
  %329 = vmatprep.subr.bf16.mxu0 0
  %330 = vmatpush1.bf16.msra.mxu0 %v289
  %331 = vmatprep.subr.bf16.mxu0 0
  %332 = vmatpush1.bf16.msra.mxu0 %v288
  %333 = vmatprep.subr.bf16.mxu0 0
  %334 = vmatpush2.bf16.msra.mxu0 0
  %335 = vmatprep.subr.bf16.mxu0 0
  %336 = vmatpush2.bf16.msra.mxu0 0
  %337 = vmatprep.subr.bf16.mxu0 0
  %338 = vmatpush2.bf16.msra.mxu0 0
  %339 = vmatprep.subr.bf16.mxu0 0
  %340 = vmatpush2.bf16.msra.mxu0 0
  %341 = vmatprep.subr.bf16.mxu0 0
  %342 = vmatpush2.bf16.msra.mxu0 0
  %343 = vmatprep.subr.bf16.mxu0 0
  %344 = vmatpush2.bf16.msra.mxu0 0
  %345 = vmatprep.subr.bf16.mxu0 0
  %346 = vmatpush2.bf16.msra.mxu0 0
  %347 = vmatprep.subr.bf16.mxu0 0
  %348 = vmatpush2.bf16.msra.mxu0 0
  %349 = vmatprep.mubr.bf16.mxu0 0
  %350 = vmatmul.mubr.bf16.gmra.mxu0 %v294
  %v351 = vpop.f32.mrf.mxu0
  %v352 = vadd.f32 0.0, %v351
  %v353 = vpop.f32.mrf.mxu0
  %v354 = vpop.f32.mrf.mxu0
  %v355 = vadd.f32 0.0, %v354
  %v356 = vpop.f32.mrf.mxu0
  %357 = vmatprep.mubr.bf16.mxu0 0
  %358 = vmatmul.mubr.bf16.gmra.mxu0 %v297
  %v359 = vpop.f32.mrf.mxu0
  %v360 = vadd.f32 0.0, %v359
  %v361 = vpop.f32.mrf.mxu0
  %v362 = vpop.f32.mrf.mxu0
  %v363 = vadd.f32 0.0, %v362
  %v364 = vpop.f32.mrf.mxu0
  %365 = vmatprep.mubr.bf16.mxu0 0
  %366 = vmatmul.mubr.bf16.gmra.mxu0 %v300
  %v367 = vpop.f32.mrf.mxu0
  %v368 = vadd.f32 0.0, %v367
  %v369 = vpop.f32.mrf.mxu0
  %v370 = vpop.f32.mrf.mxu0
  %v371 = vadd.f32 0.0, %v370
  %v372 = vpop.f32.mrf.mxu0
  %373 = vmatprep.mubr.bf16.mxu0 0
  %374 = vmatmul.mubr.bf16.gmra.mxu0 %v303
  %v375 = vpop.f32.mrf.mxu0
  %v376 = vadd.f32 0.0, %v375
  %v377 = vpop.f32.mrf.mxu0
  %v378 = vpop.f32.mrf.mxu0
  %v379 = vadd.f32 0.0, %v378
  %v380 = vpop.f32.mrf.mxu0
  %381 = vmatprep.mubr.bf16.mxu0 0
  %382 = vmatmul.mubr.bf16.gmra.mxu0 %v306
  %v383 = vpop.f32.mrf.mxu0
  %v384 = vadd.f32 0.0, %v383
  %v385 = vpop.f32.mrf.mxu0
  %v386 = vpop.f32.mrf.mxu0
  %v387 = vadd.f32 0.0, %v386
  %v388 = vpop.f32.mrf.mxu0
  %389 = vmatprep.mubr.bf16.mxu0 0
  %390 = vmatmul.mubr.bf16.gmra.mxu0 %v309
  %v391 = vpop.f32.mrf.mxu0
  %v392 = vadd.f32 0.0, %v391
  %v393 = vpop.f32.mrf.mxu0
  %v394 = vpop.f32.mrf.mxu0
  %v395 = vadd.f32 0.0, %v394
  %v396 = vpop.f32.mrf.mxu0
  %397 = vmatprep.mubr.bf16.mxu0 0
  %398 = vmatmul.mubr.bf16.gmra.mxu0 %v312
  %v399 = vpop.f32.mrf.mxu0
  %v400 = vadd.f32 0.0, %v399
  %v401 = vpop.f32.mrf.mxu0
  %v402 = vpop.f32.mrf.mxu0
  %v403 = vadd.f32 0.0, %v402
  %v404 = vpop.f32.mrf.mxu0
  %405 = vmatprep.mubr.bf16.mxu0 0
  %406 = vmatmul.mubr.bf16.gmra.mxu0 %v315
  %v407 = vpop.f32.mrf.mxu0
  %v408 = vadd.f32 0.0, %v407
  %v409 = vpop.f32.mrf.mxu0
  %v410 = vpop.f32.mrf.mxu0
  %v411 = vadd.f32 0.0, %v410
  %v412 = vpop.f32.mrf.mxu0
  %413 = vdwg.mxu0
  %v418 = vunpack.c.l.b16 %v264
  %v419 = vunpack.c.l.b16 %v265
  %v420 = vunpack.c.l.b16 %v266
  %v421 = vunpack.c.l.b16 %v267
  %v422 = vpack.c.b16 %v419, %v418
  %v423 = vpack.c.b16 %v421, %v420
  %v427 = vsel %vm292, %v151, 0
  %v430 = vsel %vm292, %v152, 0
  %v433 = vsel %vm292, %v153, 0
  %v436 = vsel %vm292, %v154, 0
  %v439 = vsel %vm292, %v155, 0
  %v442 = vsel %vm292, %v156, 0
  %v445 = vsel %vm292, %v157, 0
  %v448 = vsel %vm292, %v158, 0
  %450 = vmatprep.subr.bf16.mxu0 0
  %451 = vmatpush1.bf16.msra.mxu0 0
  %452 = vmatprep.subr.bf16.mxu0 0
  %453 = vmatpush1.bf16.msra.mxu0 0
  %454 = vmatprep.subr.bf16.mxu0 0
  %455 = vmatpush1.bf16.msra.mxu0 0
  %456 = vmatprep.subr.bf16.mxu0 0
  %457 = vmatpush1.bf16.msra.mxu0 0
  %458 = vmatprep.subr.bf16.mxu0 0
  %459 = vmatpush1.bf16.msra.mxu0 0
  %460 = vmatprep.subr.bf16.mxu0 0
  %461 = vmatpush1.bf16.msra.mxu0 0
  %462 = vmatprep.subr.bf16.mxu0 0
  %463 = vmatpush1.bf16.msra.mxu0 %v423
  %464 = vmatprep.subr.bf16.mxu0 0
  %465 = vmatpush1.bf16.msra.mxu0 %v422
  %466 = vmatprep.subr.bf16.mxu0 0
  %467 = vmatpush2.bf16.msra.mxu0 0
  %468 = vmatprep.subr.bf16.mxu0 0
  %469 = vmatpush2.bf16.msra.mxu0 0
  %470 = vmatprep.subr.bf16.mxu0 0
  %471 = vmatpush2.bf16.msra.mxu0 0
  %472 = vmatprep.subr.bf16.mxu0 0
  %473 = vmatpush2.bf16.msra.mxu0 0
  %474 = vmatprep.subr.bf16.mxu0 0
  %475 = vmatpush2.bf16.msra.mxu0 0
  %476 = vmatprep.subr.bf16.mxu0 0
  %477 = vmatpush2.bf16.msra.mxu0 0
  %478 = vmatprep.subr.bf16.mxu0 0
  %479 = vmatpush2.bf16.msra.mxu0 0
  %480 = vmatprep.subr.bf16.mxu0 0
  %481 = vmatpush2.bf16.msra.mxu0 0
  %482 = vmatprep.mubr.bf16.mxu0 0
  %483 = vmatmul.mubr.bf16.gmra.mxu0 %v427
  %v484 = vpop.f32.mrf.mxu0
  %v485 = vadd.f32 %v352, %v484
  %v486 = vpop.f32.mrf.mxu0
  %v487 = vpop.f32.mrf.mxu0
  %v488 = vadd.f32 %v355, %v487
  %v489 = vpop.f32.mrf.mxu0
  %490 = vmatprep.mubr.bf16.mxu0 0
  %491 = vmatmul.mubr.bf16.gmra.mxu0 %v430
  %v492 = vpop.f32.mrf.mxu0
  %v493 = vadd.f32 %v360, %v492
  %v494 = vpop.f32.mrf.mxu0
  %v495 = vpop.f32.mrf.mxu0
  %v496 = vadd.f32 %v363, %v495
  %v497 = vpop.f32.mrf.mxu0
  %498 = vmatprep.mubr.bf16.mxu0 0
  %499 = vmatmul.mubr.bf16.gmra.mxu0 %v433
  %v500 = vpop.f32.mrf.mxu0
  %v501 = vadd.f32 %v368, %v500
  %v502 = vpop.f32.mrf.mxu0
  %v503 = vpop.f32.mrf.mxu0
  %v504 = vadd.f32 %v371, %v503
  %v505 = vpop.f32.mrf.mxu0
  %506 = vmatprep.mubr.bf16.mxu0 0
  %507 = vmatmul.mubr.bf16.gmra.mxu0 %v436
  %v508 = vpop.f32.mrf.mxu0
  %v509 = vadd.f32 %v376, %v508
  %v510 = vpop.f32.mrf.mxu0
  %v511 = vpop.f32.mrf.mxu0
  %v512 = vadd.f32 %v379, %v511
  %v513 = vpop.f32.mrf.mxu0
  %514 = vmatprep.mubr.bf16.mxu0 0
  %515 = vmatmul.mubr.bf16.gmra.mxu0 %v439
  %v516 = vpop.f32.mrf.mxu0
  %v517 = vadd.f32 %v384, %v516
  %v518 = vpop.f32.mrf.mxu0
  %v519 = vpop.f32.mrf.mxu0
  %v520 = vadd.f32 %v387, %v519
  %v521 = vpop.f32.mrf.mxu0
  %522 = vmatprep.mubr.bf16.mxu0 0
  %523 = vmatmul.mubr.bf16.gmra.mxu0 %v442
  %v524 = vpop.f32.mrf.mxu0
  %v525 = vadd.f32 %v392, %v524
  %v526 = vpop.f32.mrf.mxu0
  %v527 = vpop.f32.mrf.mxu0
  %v528 = vadd.f32 %v395, %v527
  %v529 = vpop.f32.mrf.mxu0
  %530 = vmatprep.mubr.bf16.mxu0 0
  %531 = vmatmul.mubr.bf16.gmra.mxu0 %v445
  %v532 = vpop.f32.mrf.mxu0
  %v533 = vadd.f32 %v400, %v532
  %v534 = vpop.f32.mrf.mxu0
  %v535 = vpop.f32.mrf.mxu0
  %v536 = vadd.f32 %v403, %v535
  %v537 = vpop.f32.mrf.mxu0
  %538 = vmatprep.mubr.bf16.mxu0 0
  %539 = vmatmul.mubr.bf16.gmra.mxu0 %v448
  %v540 = vpop.f32.mrf.mxu0
  %v541 = vadd.f32 %v408, %v540
  %v542 = vpop.f32.mrf.mxu0
  %v543 = vpop.f32.mrf.mxu0
  %v544 = vadd.f32 %v411, %v543
  %v545 = vpop.f32.mrf.mxu0
  %546 = vdwg.mxu0
  %v547 = vld [vmem:[%s4] sm:$0x1]
  %v549 = vlaneseq
  %v550 = vshrl.u32 %v549, 7
  %v551 = vsub.s32 0, %v550
  %v552 = vrot.slane %v547, %v551
  %v554 = vadd.f32 %v485, %v552
  %v555 = vadd.f32 %v488, %v552
  %v556 = vadd.f32 %v493, %v552
  %v557 = vadd.f32 %v496, %v552
  %v558 = vadd.f32 %v501, %v552
  %v559 = vadd.f32 %v504, %v552
  %v560 = vadd.f32 %v509, %v552
  %v561 = vadd.f32 %v512, %v552
  %v562 = vadd.f32 %v517, %v552
  %v563 = vadd.f32 %v520, %v552
  %v564 = vadd.f32 %v525, %v552
  %v565 = vadd.f32 %v528, %v552
  %v566 = vadd.f32 %v533, %v552
  %v567 = vadd.f32 %v536, %v552
  %v568 = vadd.f32 %v541, %v552
  %v569 = vadd.f32 %v544, %v552
  %v570 = vmax.f32 %v554, 0.0
  %v571 = vmax.f32 %v555, 0.0
  %v572 = vmax.f32 %v556, 0.0
  %v573 = vmax.f32 %v557, 0.0
  %v574 = vmax.f32 %v558, 0.0
  %v575 = vmax.f32 %v559, 0.0
  %v576 = vmax.f32 %v560, 0.0
  %v577 = vmax.f32 %v561, 0.0
  %v578 = vmax.f32 %v562, 0.0
  %v579 = vmax.f32 %v563, 0.0
  %v580 = vmax.f32 %v564, 0.0
  %v581 = vmax.f32 %v565, 0.0
  %v582 = vmax.f32 %v566, 0.0
  %v583 = vmax.f32 %v567, 0.0
  %v584 = vmax.f32 %v568, 0.0
  %v585 = vmax.f32 %v569, 0.0
  %v586 = vpack.c.bf16 %v571, %v570
  %v587 = vpack.c.bf16 %v573, %v572
  %v588 = vpack.c.bf16 %v575, %v574
  %v589 = vpack.c.bf16 %v577, %v576
  %v590 = vpack.c.bf16 %v579, %v578
  %v591 = vpack.c.bf16 %v581, %v580
  %v592 = vpack.c.bf16 %v583, %v582
  %v593 = vpack.c.bf16 %v585, %v584
  %594 = vmatprep.subr.bf16.mxu0 0
  %595 = vmatpush1.bf16.msra.mxu0 %v593
  %596 = vmatprep.subr.bf16.mxu0 0
  %597 = vmatpush1.bf16.msra.mxu0 %v592
  %598 = vmatprep.subr.bf16.mxu0 0
  %599 = vmatpush1.bf16.msra.mxu0 %v591
  %600 = vmatprep.subr.bf16.mxu0 0
  %601 = vmatpush1.bf16.msra.mxu0 %v590
  %602 = vmatprep.subr.bf16.mxu0 0
  %603 = vmatpush1.bf16.msra.mxu0 %v589
  %604 = vmatprep.subr.bf16.mxu0 0
  %605 = vmatpush1.bf16.msra.mxu0 %v588
  %606 = vmatprep.subr.bf16.mxu0 0
  %607 = vmatpush1.bf16.msra.mxu0 %v587
  %608 = vmatprep.subr.bf16.mxu0 0
  %609 = vmatpush1.bf16.msra.mxu0 %v586
  %610 = vmatprep.subr.bf16.mxu0 0
  %611 = vmatpush2.bf16.msra.mxu0 0
  %612 = vmatprep.subr.bf16.mxu0 0
  %613 = vmatpush2.bf16.msra.mxu0 0
  %614 = vmatprep.subr.bf16.mxu0 0
  %615 = vmatpush2.bf16.msra.mxu0 0
  %616 = vmatprep.subr.bf16.mxu0 0
  %617 = vmatpush2.bf16.msra.mxu0 0
  %618 = vmatprep.subr.bf16.mxu0 0
  %619 = vmatpush2.bf16.msra.mxu0 0
  %620 = vmatprep.subr.bf16.mxu0 0
  %621 = vmatpush2.bf16.msra.mxu0 0
  %622 = vmatprep.subr.bf16.mxu0 0
  %623 = vmatpush2.bf16.msra.mxu0 0
  %624 = vmatprep.subr.bf16.mxu0 0
  %625 = vmatpush2.bf16.msra.mxu0 0
  %626 = vmatprep.mubr.bf16.mxu0 0
  %627 = vmatmul.mubr.bf16.gmra.mxu0 %v103
  %v628 = vpop.f32.mrf.mxu0
  %v629 = vadd.f32 0.0, %v628
  %v630 = vpop.f32.mrf.mxu0
  %v631 = vpop.f32.mrf.mxu0
  %v632 = vadd.f32 0.0, %v631
  %v633 = vpop.f32.mrf.mxu0
  %634 = vmatprep.mubr.bf16.mxu0 0
  %635 = vmatmul.mubr.bf16.gmra.mxu0 %v104
  %v636 = vpop.f32.mrf.mxu0
  %v637 = vadd.f32 0.0, %v636
  %v638 = vpop.f32.mrf.mxu0
  %v639 = vpop.f32.mrf.mxu0
  %v640 = vadd.f32 0.0, %v639
  %v641 = vpop.f32.mrf.mxu0
  %642 = vmatprep.mubr.bf16.mxu0 0
  %643 = vmatmul.mubr.bf16.gmra.mxu0 %v105
  %v644 = vpop.f32.mrf.mxu0
  %v645 = vadd.f32 0.0, %v644
  %v646 = vpop.f32.mrf.mxu0
  %v647 = vpop.f32.mrf.mxu0
  %v648 = vadd.f32 0.0, %v647
  %v649 = vpop.f32.mrf.mxu0
  %650 = vmatprep.mubr.bf16.mxu0 0
  %651 = vmatmul.mubr.bf16.gmra.mxu0 %v106
  %v652 = vpop.f32.mrf.mxu0
  %v653 = vadd.f32 0.0, %v652
  %v654 = vpop.f32.mrf.mxu0
  %v655 = vpop.f32.mrf.mxu0
  %v656 = vadd.f32 0.0, %v655
  %v657 = vpop.f32.mrf.mxu0
  %658 = vmatprep.mubr.bf16.mxu0 0
  %659 = vmatmul.mubr.bf16.gmra.mxu0 %v107
  %v660 = vpop.f32.mrf.mxu0
  %v661 = vadd.f32 0.0, %v660
  %v662 = vpop.f32.mrf.mxu0
  %v663 = vpop.f32.mrf.mxu0
  %v664 = vadd.f32 0.0, %v663
  %v665 = vpop.f32.mrf.mxu0
  %666 = vmatprep.mubr.bf16.mxu0 0
  %667 = vmatmul.mubr.bf16.gmra.mxu0 %v108
  %v668 = vpop.f32.mrf.mxu0
  %v669 = vadd.f32 0.0, %v668
  %v670 = vpop.f32.mrf.mxu0
  %v671 = vpop.f32.mrf.mxu0
  %v672 = vadd.f32 0.0, %v671
  %v673 = vpop.f32.mrf.mxu0
  %674 = vmatprep.mubr.bf16.mxu0 0
  %675 = vmatmul.mubr.bf16.gmra.mxu0 %v109
  %v676 = vpop.f32.mrf.mxu0
  %v677 = vadd.f32 0.0, %v676
  %v678 = vpop.f32.mrf.mxu0
  %v679 = vpop.f32.mrf.mxu0
  %v680 = vadd.f32 0.0, %v679
  %v681 = vpop.f32.mrf.mxu0
  %682 = vmatprep.mubr.bf16.mxu0 0
  %683 = vmatmul.mubr.bf16.gmra.mxu0 %v110
  %v684 = vpop.f32.mrf.mxu0
  %v685 = vadd.f32 0.0, %v684
  %v686 = vpop.f32.mrf.mxu0
  %v687 = vpop.f32.mrf.mxu0
  %v688 = vadd.f32 0.0, %v687
  %v689 = vpop.f32.mrf.mxu0
  %690 = vdwg.mxu0
  %v691 = vld [vmem:[%s5] sm:$0xf]
  %v692 = vld [vmem:[%s5 + $0x4] sm:$0xf]
  %v693 = vld [vmem:[%s5 + $0x8] sm:$0xf]
  %v694 = vld [vmem:[%s5 + $0xc] sm:$0xf]
  %v695 = vpack.c.bf16 %v632, %v629
  %v696 = vpack.c.bf16 %v640, %v637
  %v697 = vpack.c.bf16 %v648, %v645
  %v698 = vpack.c.bf16 %v656, %v653
  %v699 = vpack.c.bf16 %v664, %v661
  %v700 = vpack.c.bf16 %v672, %v669
  %v701 = vpack.c.bf16 %v680, %v677
  %v702 = vpack.c.bf16 %v688, %v685
  %v703 = vld [vmem:[%s6] sm:$0xf]
  %v704 = vld [vmem:[%s6 + $0x4] sm:$0xf]
  %v705 = vld [vmem:[%s6 + $0x8] sm:$0xf]
  %v706 = vld [vmem:[%s6 + $0xc] sm:$0xf]
  %v711 = vunpack.c.l.b16 %v703
  %v712 = vunpack.c.l.b16 %v704
  %v713 = vunpack.c.l.b16 %v705
  %v714 = vunpack.c.l.b16 %v706
  %v715 = vpack.c.b16 %v712, %v711
  %v716 = vpack.c.b16 %v714, %v713
  %v720 = vsel %vm292, %v695, 0
  %v723 = vsel %vm292, %v696, 0
  %v726 = vsel %vm292, %v697, 0
  %v729 = vsel %vm292, %v698, 0
  %v732 = vsel %vm292, %v699, 0
  %v735 = vsel %vm292, %v700, 0
  %v738 = vsel %vm292, %v701, 0
  %v741 = vsel %vm292, %v702, 0
  %743 = vmatprep.subr.bf16.mxu0 0
  %744 = vmatpush1.bf16.msra.mxu0 0
  %745 = vmatprep.subr.bf16.mxu0 0
  %746 = vmatpush1.bf16.msra.mxu0 0
  %747 = vmatprep.subr.bf16.mxu0 0
  %748 = vmatpush1.bf16.msra.mxu0 0
  %749 = vmatprep.subr.bf16.mxu0 0
  %750 = vmatpush1.bf16.msra.mxu0 0
  %751 = vmatprep.subr.bf16.mxu0 0
  %752 = vmatpush1.bf16.msra.mxu0 0
  %753 = vmatprep.subr.bf16.mxu0 0
  %754 = vmatpush1.bf16.msra.mxu0 0
  %755 = vmatprep.subr.bf16.mxu0 0
  %756 = vmatpush1.bf16.msra.mxu0 %v716
  %757 = vmatprep.subr.bf16.mxu0 0
  %758 = vmatpush1.bf16.msra.mxu0 %v715
  %759 = vmatprep.subr.bf16.mxu0 0
  %760 = vmatpush2.bf16.msra.mxu0 0
  %761 = vmatprep.subr.bf16.mxu0 0
  %762 = vmatpush2.bf16.msra.mxu0 0
  %763 = vmatprep.subr.bf16.mxu0 0
  %764 = vmatpush2.bf16.msra.mxu0 0
  %765 = vmatprep.subr.bf16.mxu0 0
  %766 = vmatpush2.bf16.msra.mxu0 0
  %767 = vmatprep.subr.bf16.mxu0 0
  %768 = vmatpush2.bf16.msra.mxu0 0
  %769 = vmatprep.subr.bf16.mxu0 0
  %770 = vmatpush2.bf16.msra.mxu0 0
  %771 = vmatprep.subr.bf16.mxu0 0
  %772 = vmatpush2.bf16.msra.mxu0 0
  %773 = vmatprep.subr.bf16.mxu0 0
  %774 = vmatpush2.bf16.msra.mxu0 0
  %775 = vmatprep.mubr.bf16.mxu0 0
  %776 = vmatmul.mubr.bf16.gmra.mxu0 %v720
  %v777 = vpop.f32.mrf.mxu0
  %v778 = vadd.f32 0.0, %v777
  %v779 = vpop.f32.mrf.mxu0
  %v780 = vpop.f32.mrf.mxu0
  %v781 = vadd.f32 0.0, %v780
  %v782 = vpop.f32.mrf.mxu0
  %783 = vmatprep.mubr.bf16.mxu0 0
  %784 = vmatmul.mubr.bf16.gmra.mxu0 %v723
  %v785 = vpop.f32.mrf.mxu0
  %v786 = vadd.f32 0.0, %v785
  %v787 = vpop.f32.mrf.mxu0
  %v788 = vpop.f32.mrf.mxu0
  %v789 = vadd.f32 0.0, %v788
  %v790 = vpop.f32.mrf.mxu0
  %791 = vmatprep.mubr.bf16.mxu0 0
  %792 = vmatmul.mubr.bf16.gmra.mxu0 %v726
  %v793 = vpop.f32.mrf.mxu0
  %v794 = vadd.f32 0.0, %v793
  %v795 = vpop.f32.mrf.mxu0
  %v796 = vpop.f32.mrf.mxu0
  %v797 = vadd.f32 0.0, %v796
  %v798 = vpop.f32.mrf.mxu0
  %799 = vmatprep.mubr.bf16.mxu0 0
  %800 = vmatmul.mubr.bf16.gmra.mxu0 %v729
  %v801 = vpop.f32.mrf.mxu0
  %v802 = vadd.f32 0.0, %v801
  %v803 = vpop.f32.mrf.mxu0
  %v804 = vpop.f32.mrf.mxu0
  %v805 = vadd.f32 0.0, %v804
  %v806 = vpop.f32.mrf.mxu0
  %807 = vmatprep.mubr.bf16.mxu0 0
  %808 = vmatmul.mubr.bf16.gmra.mxu0 %v732
  %v809 = vpop.f32.mrf.mxu0
  %v810 = vadd.f32 0.0, %v809
  %v811 = vpop.f32.mrf.mxu0
  %v812 = vpop.f32.mrf.mxu0
  %v813 = vadd.f32 0.0, %v812
  %v814 = vpop.f32.mrf.mxu0
  %815 = vmatprep.mubr.bf16.mxu0 0
  %816 = vmatmul.mubr.bf16.gmra.mxu0 %v735
  %v817 = vpop.f32.mrf.mxu0
  %v818 = vadd.f32 0.0, %v817
  %v819 = vpop.f32.mrf.mxu0
  %v820 = vpop.f32.mrf.mxu0
  %v821 = vadd.f32 0.0, %v820
  %v822 = vpop.f32.mrf.mxu0
  %823 = vmatprep.mubr.bf16.mxu0 0
  %824 = vmatmul.mubr.bf16.gmra.mxu0 %v738
  %v825 = vpop.f32.mrf.mxu0
  %v826 = vadd.f32 0.0, %v825
  %v827 = vpop.f32.mrf.mxu0
  %v828 = vpop.f32.mrf.mxu0
  %v829 = vadd.f32 0.0, %v828
  %v830 = vpop.f32.mrf.mxu0
  %831 = vmatprep.mubr.bf16.mxu0 0
  %832 = vmatmul.mubr.bf16.gmra.mxu0 %v741
  %v833 = vpop.f32.mrf.mxu0
  %v834 = vadd.f32 0.0, %v833
  %v835 = vpop.f32.mrf.mxu0
  %v836 = vpop.f32.mrf.mxu0
  %v837 = vadd.f32 0.0, %v836
  %v838 = vpop.f32.mrf.mxu0
  %839 = vdwg.mxu0
  %v844 = vunpack.c.l.b16 %v691
  %v845 = vunpack.c.l.b16 %v692
  %v846 = vunpack.c.l.b16 %v693
  %v847 = vunpack.c.l.b16 %v694
  %v848 = vpack.c.b16 %v845, %v844
  %v849 = vpack.c.b16 %v847, %v846
  %v853 = vsel %vm292, %v586, 0
  %v856 = vsel %vm292, %v587, 0
  %v859 = vsel %vm292, %v588, 0
  %v862 = vsel %vm292, %v589, 0
  %v865 = vsel %vm292, %v590, 0
  %v868 = vsel %vm292, %v591, 0
  %v871 = vsel %vm292, %v592, 0
  %v874 = vsel %vm292, %v593, 0
  %876 = vmatprep.subr.bf16.mxu0 0
  %877 = vmatpush1.bf16.msra.mxu0 0
  %878 = vmatprep.subr.bf16.mxu0 0
  %879 = vmatpush1.bf16.msra.mxu0 0
  %880 = vmatprep.subr.bf16.mxu0 0
  %881 = vmatpush1.bf16.msra.mxu0 0
  %882 = vmatprep.subr.bf16.mxu0 0
  %883 = vmatpush1.bf16.msra.mxu0 0
  %884 = vmatprep.subr.bf16.mxu0 0
  %885 = vmatpush1.bf16.msra.mxu0 0
  %886 = vmatprep.subr.bf16.mxu0 0
  %887 = vmatpush1.bf16.msra.mxu0 0
  %888 = vmatprep.subr.bf16.mxu0 0
  %889 = vmatpush1.bf16.msra.mxu0 %v849
  %890 = vmatprep.subr.bf16.mxu0 0
  %891 = vmatpush1.bf16.msra.mxu0 %v848
  %892 = vmatprep.subr.bf16.mxu0 0
  %893 = vmatpush2.bf16.msra.mxu0 0
  %894 = vmatprep.subr.bf16.mxu0 0
  %895 = vmatpush2.bf16.msra.mxu0 0
  %896 = vmatprep.subr.bf16.mxu0 0
  %897 = vmatpush2.bf16.msra.mxu0 0
  %898 = vmatprep.subr.bf16.mxu0 0
  %899 = vmatpush2.bf16.msra.mxu0 0
  %900 = vmatprep.subr.bf16.mxu0 0
  %901 = vmatpush2.bf16.msra.mxu0 0
  %902 = vmatprep.subr.bf16.mxu0 0
  %903 = vmatpush2.bf16.msra.mxu0 0
  %904 = vmatprep.subr.bf16.mxu0 0
  %905 = vmatpush2.bf16.msra.mxu0 0
  %906 = vmatprep.subr.bf16.mxu0 0
  %907 = vmatpush2.bf16.msra.mxu0 0
  %908 = vmatprep.mubr.bf16.mxu0 0
  %909 = vmatmul.mubr.bf16.gmra.mxu0 %v853
  %v910 = vpop.f32.mrf.mxu0
  %v911 = vadd.f32 %v778, %v910
  %v912 = vpop.f32.mrf.mxu0
  %v913 = vpop.f32.mrf.mxu0
  %v914 = vadd.f32 %v781, %v913
  %v915 = vpop.f32.mrf.mxu0
  %916 = vmatprep.mubr.bf16.mxu0 0
  %917 = vmatmul.mubr.bf16.gmra.mxu0 %v856
  %v918 = vpop.f32.mrf.mxu0
  %v919 = vadd.f32 %v786, %v918
  %v920 = vpop.f32.mrf.mxu0
  %v921 = vpop.f32.mrf.mxu0
  %v922 = vadd.f32 %v789, %v921
  %v923 = vpop.f32.mrf.mxu0
  %924 = vmatprep.mubr.bf16.mxu0 0
  %925 = vmatmul.mubr.bf16.gmra.mxu0 %v859
  %v926 = vpop.f32.mrf.mxu0
  %v927 = vadd.f32 %v794, %v926
  %v928 = vpop.f32.mrf.mxu0
  %v929 = vpop.f32.mrf.mxu0
  %v930 = vadd.f32 %v797, %v929
  %v931 = vpop.f32.mrf.mxu0
  %932 = vmatprep.mubr.bf16.mxu0 0
  %933 = vmatmul.mubr.bf16.gmra.mxu0 %v862
  %v934 = vpop.f32.mrf.mxu0
  %v935 = vadd.f32 %v802, %v934
  %v936 = vpop.f32.mrf.mxu0
  %v937 = vpop.f32.mrf.mxu0
  %v938 = vadd.f32 %v805, %v937
  %v939 = vpop.f32.mrf.mxu0
  %940 = vmatprep.mubr.bf16.mxu0 0
  %941 = vmatmul.mubr.bf16.gmra.mxu0 %v865
  %v942 = vpop.f32.mrf.mxu0
  %v943 = vadd.f32 %v810, %v942
  %v944 = vpop.f32.mrf.mxu0
  %v945 = vpop.f32.mrf.mxu0
  %v946 = vadd.f32 %v813, %v945
  %v947 = vpop.f32.mrf.mxu0
  %948 = vmatprep.mubr.bf16.mxu0 0
  %949 = vmatmul.mubr.bf16.gmra.mxu0 %v868
  %v950 = vpop.f32.mrf.mxu0
  %v951 = vadd.f32 %v818, %v950
  %v952 = vpop.f32.mrf.mxu0
  %v953 = vpop.f32.mrf.mxu0
  %v954 = vadd.f32 %v821, %v953
  %v955 = vpop.f32.mrf.mxu0
  %956 = vmatprep.mubr.bf16.mxu0 0
  %957 = vmatmul.mubr.bf16.gmra.mxu0 %v871
  %v958 = vpop.f32.mrf.mxu0
  %v959 = vadd.f32 %v826, %v958
  %v960 = vpop.f32.mrf.mxu0
  %v961 = vpop.f32.mrf.mxu0
  %v962 = vadd.f32 %v829, %v961
  %v963 = vpop.f32.mrf.mxu0
  %964 = vmatprep.mubr.bf16.mxu0 0
  %965 = vmatmul.mubr.bf16.gmra.mxu0 %v874
  %v966 = vpop.f32.mrf.mxu0
  %v967 = vadd.f32 %v834, %v966
  %v968 = vpop.f32.mrf.mxu0
  %v969 = vpop.f32.mrf.mxu0
  %v970 = vadd.f32 %v837, %v969
  %v971 = vpop.f32.mrf.mxu0
  %972 = vdwg.mxu0
  %v973 = vld [vmem:[%s7] sm:$0x1]
  %v975 = vlaneseq
  %v976 = vshrl.u32 %v975, 7
  %v977 = vsub.s32 0, %v976
  %v978 = vrot.slane %v973, %v977
  %v980 = vadd.f32 %v911, %v978
  %v981 = vadd.f32 %v914, %v978
  %v982 = vadd.f32 %v919, %v978
  %v983 = vadd.f32 %v922, %v978
  %v984 = vadd.f32 %v927, %v978
  %v985 = vadd.f32 %v930, %v978
  %v986 = vadd.f32 %v935, %v978
  %v987 = vadd.f32 %v938, %v978
  %v988 = vadd.f32 %v943, %v978
  %v989 = vadd.f32 %v946, %v978
  %v990 = vadd.f32 %v951, %v978
  %v991 = vadd.f32 %v954, %v978
  %v992 = vadd.f32 %v959, %v978
  %v993 = vadd.f32 %v962, %v978
  %v994 = vadd.f32 %v967, %v978
  %v995 = vadd.f32 %v970, %v978
  %v996 = vmax.f32 %v980, 0.0
  %v997 = vmax.f32 %v981, 0.0
  %v998 = vmax.f32 %v982, 0.0
  %v999 = vmax.f32 %v983, 0.0
  %v1000 = vmax.f32 %v984, 0.0
  %v1001 = vmax.f32 %v985, 0.0
  %v1002 = vmax.f32 %v986, 0.0
  %v1003 = vmax.f32 %v987, 0.0
  %v1004 = vmax.f32 %v988, 0.0
  %v1005 = vmax.f32 %v989, 0.0
  %v1006 = vmax.f32 %v990, 0.0
  %v1007 = vmax.f32 %v991, 0.0
  %v1008 = vmax.f32 %v992, 0.0
  %v1009 = vmax.f32 %v993, 0.0
  %v1010 = vmax.f32 %v994, 0.0
  %v1011 = vmax.f32 %v995, 0.0
  %v1012 = vpack.c.bf16 %v997, %v996
  %v1013 = vpack.c.bf16 %v999, %v998
  %v1014 = vpack.c.bf16 %v1001, %v1000
  %v1015 = vpack.c.bf16 %v1003, %v1002
  %v1016 = vpack.c.bf16 %v1005, %v1004
  %v1017 = vpack.c.bf16 %v1007, %v1006
  %v1018 = vpack.c.bf16 %v1009, %v1008
  %v1019 = vpack.c.bf16 %v1011, %v1010
  %1020 = vmatprep.subr.bf16.mxu0 0
  %1021 = vmatpush1.bf16.msra.mxu0 %v1019
  %1022 = vmatprep.subr.bf16.mxu0 0
  %1023 = vmatpush1.bf16.msra.mxu0 %v1018
  %1024 = vmatprep.subr.bf16.mxu0 0
  %1025 = vmatpush1.bf16.msra.mxu0 %v1017
  %1026 = vmatprep.subr.bf16.mxu0 0
  %1027 = vmatpush1.bf16.msra.mxu0 %v1016
  %1028 = vmatprep.subr.bf16.mxu0 0
  %1029 = vmatpush1.bf16.msra.mxu0 %v1015
  %1030 = vmatprep.subr.bf16.mxu0 0
  %1031 = vmatpush1.bf16.msra.mxu0 %v1014
  %1032 = vmatprep.subr.bf16.mxu0 0
  %1033 = vmatpush1.bf16.msra.mxu0 %v1013
  %1034 = vmatprep.subr.bf16.mxu0 0
  %1035 = vmatpush1.bf16.msra.mxu0 %v1012
  %1036 = vmatprep.subr.bf16.mxu0 0
  %1037 = vmatpush2.bf16.msra.mxu0 0
  %1038 = vmatprep.subr.bf16.mxu0 0
  %1039 = vmatpush2.bf16.msra.mxu0 0
  %1040 = vmatprep.subr.bf16.mxu0 0
  %1041 = vmatpush2.bf16.msra.mxu0 0
  %1042 = vmatprep.subr.bf16.mxu0 0
  %1043 = vmatpush2.bf16.msra.mxu0 0
  %1044 = vmatprep.subr.bf16.mxu0 0
  %1045 = vmatpush2.bf16.msra.mxu0 0
  %1046 = vmatprep.subr.bf16.mxu0 0
  %1047 = vmatpush2.bf16.msra.mxu0 0
  %1048 = vmatprep.subr.bf16.mxu0 0
  %1049 = vmatpush2.bf16.msra.mxu0 0
  %1050 = vmatprep.subr.bf16.mxu0 0
  %1051 = vmatpush2.bf16.msra.mxu0 0
  %1052 = vmatprep.mubr.bf16.mxu0 0
  %1053 = vmatmul.mubr.bf16.gmra.mxu0 %v103
  %v1054 = vpop.f32.mrf.mxu0
  %v1055 = vadd.f32 0.0, %v1054
  %v1056 = vpop.f32.mrf.mxu0
  %v1057 = vpop.f32.mrf.mxu0
  %v1058 = vadd.f32 0.0, %v1057
  %v1059 = vpop.f32.mrf.mxu0
  %1060 = vmatprep.mubr.bf16.mxu0 0
  %1061 = vmatmul.mubr.bf16.gmra.mxu0 %v104
  %v1062 = vpop.f32.mrf.mxu0
  %v1063 = vadd.f32 0.0, %v1062
  %v1064 = vpop.f32.mrf.mxu0
  %v1065 = vpop.f32.mrf.mxu0
  %v1066 = vadd.f32 0.0, %v1065
  %v1067 = vpop.f32.mrf.mxu0
  %1068 = vmatprep.mubr.bf16.mxu0 0
  %1069 = vmatmul.mubr.bf16.gmra.mxu0 %v105
  %v1070 = vpop.f32.mrf.mxu0
  %v1071 = vadd.f32 0.0, %v1070
  %v1072 = vpop.f32.mrf.mxu0
  %v1073 = vpop.f32.mrf.mxu0
  %v1074 = vadd.f32 0.0, %v1073
  %v1075 = vpop.f32.mrf.mxu0
  %1076 = vmatprep.mubr.bf16.mxu0 0
  %1077 = vmatmul.mubr.bf16.gmra.mxu0 %v106
  %v1078 = vpop.f32.mrf.mxu0
  %v1079 = vadd.f32 0.0, %v1078
  %v1080 = vpop.f32.mrf.mxu0
  %v1081 = vpop.f32.mrf.mxu0
  %v1082 = vadd.f32 0.0, %v1081
  %v1083 = vpop.f32.mrf.mxu0
  %1084 = vmatprep.mubr.bf16.mxu0 0
  %1085 = vmatmul.mubr.bf16.gmra.mxu0 %v107
  %v1086 = vpop.f32.mrf.mxu0
  %v1087 = vadd.f32 0.0, %v1086
  %v1088 = vpop.f32.mrf.mxu0
  %v1089 = vpop.f32.mrf.mxu0
  %v1090 = vadd.f32 0.0, %v1089
  %v1091 = vpop.f32.mrf.mxu0
  %1092 = vmatprep.mubr.bf16.mxu0 0
  %1093 = vmatmul.mubr.bf16.gmra.mxu0 %v108
  %v1094 = vpop.f32.mrf.mxu0
  %v1095 = vadd.f32 0.0, %v1094
  %v1096 = vpop.f32.mrf.mxu0
  %v1097 = vpop.f32.mrf.mxu0
  %v1098 = vadd.f32 0.0, %v1097
  %v1099 = vpop.f32.mrf.mxu0
  %1100 = vmatprep.mubr.bf16.mxu0 0
  %1101 = vmatmul.mubr.bf16.gmra.mxu0 %v109
  %v1102 = vpop.f32.mrf.mxu0
  %v1103 = vadd.f32 0.0, %v1102
  %v1104 = vpop.f32.mrf.mxu0
  %v1105 = vpop.f32.mrf.mxu0
  %v1106 = vadd.f32 0.0, %v1105
  %v1107 = vpop.f32.mrf.mxu0
  %1108 = vmatprep.mubr.bf16.mxu0 0
  %1109 = vmatmul.mubr.bf16.gmra.mxu0 %v110
  %v1110 = vpop.f32.mrf.mxu0
  %v1111 = vadd.f32 0.0, %v1110
  %v1112 = vpop.f32.mrf.mxu0
  %v1113 = vpop.f32.mrf.mxu0
  %v1114 = vadd.f32 0.0, %v1113
  %v1115 = vpop.f32.mrf.mxu0
  %1116 = vdwg.mxu0
  %v1117 = vld [vmem:[%s8] sm:$0xf]
  %v1118 = vld [vmem:[%s8 + $0x4] sm:$0xf]
  %v1119 = vld [vmem:[%s8 + $0x8] sm:$0xf]
  %v1120 = vld [vmem:[%s8 + $0xc] sm:$0xf]
  %v1121 = vpack.c.bf16 %v1058, %v1055
  %v1122 = vpack.c.bf16 %v1066, %v1063
  %v1123 = vpack.c.bf16 %v1074, %v1071
  %v1124 = vpack.c.bf16 %v1082, %v1079
  %v1125 = vpack.c.bf16 %v1090, %v1087
  %v1126 = vpack.c.bf16 %v1098, %v1095
  %v1127 = vpack.c.bf16 %v1106, %v1103
  %v1128 = vpack.c.bf16 %v1114, %v1111
  %v1129 = vld [vmem:[%s9] sm:$0xf]
  %v1130 = vld [vmem:[%s9 + $0x4] sm:$0xf]
  %v1131 = vld [vmem:[%s9 + $0x8] sm:$0xf]
  %v1132 = vld [vmem:[%s9 + $0xc] sm:$0xf]
  %v1137 = vunpack.c.l.b16 %v1129
  %v1138 = vunpack.c.l.b16 %v1130
  %v1139 = vunpack.c.l.b16 %v1131
  %v1140 = vunpack.c.l.b16 %v1132
  %v1141 = vpack.c.b16 %v1138, %v1137
  %v1142 = vpack.c.b16 %v1140, %v1139
  %v1146 = vsel %vm292, %v1121, 0
  %v1149 = vsel %vm292, %v1122, 0
  %v1152 = vsel %vm292, %v1123, 0
  %v1155 = vsel %vm292, %v1124, 0
  %v1158 = vsel %vm292, %v1125, 0
  %v1161 = vsel %vm292, %v1126, 0
  %v1164 = vsel %vm292, %v1127, 0
  %v1167 = vsel %vm292, %v1128, 0
  %1169 = vmatprep.subr.bf16.mxu0 0
  %1170 = vmatpush1.bf16.msra.mxu0 0
  %1171 = vmatprep.subr.bf16.mxu0 0
  %1172 = vmatpush1.bf16.msra.mxu0 0
  %1173 = vmatprep.subr.bf16.mxu0 0
  %1174 = vmatpush1.bf16.msra.mxu0 0
  %1175 = vmatprep.subr.bf16.mxu0 0
  %1176 = vmatpush1.bf16.msra.mxu0 0
  %1177 = vmatprep.subr.bf16.mxu0 0
  %1178 = vmatpush1.bf16.msra.mxu0 0
  %1179 = vmatprep.subr.bf16.mxu0 0
  %1180 = vmatpush1.bf16.msra.mxu0 0
  %1181 = vmatprep.subr.bf16.mxu0 0
  %1182 = vmatpush1.bf16.msra.mxu0 %v1142
  %1183 = vmatprep.subr.bf16.mxu0 0
  %1184 = vmatpush1.bf16.msra.mxu0 %v1141
  %1185 = vmatprep.subr.bf16.mxu0 0
  %1186 = vmatpush2.bf16.msra.mxu0 0
  %1187 = vmatprep.subr.bf16.mxu0 0
  %1188 = vmatpush2.bf16.msra.mxu0 0
  %1189 = vmatprep.subr.bf16.mxu0 0
  %1190 = vmatpush2.bf16.msra.mxu0 0
  %1191 = vmatprep.subr.bf16.mxu0 0
  %1192 = vmatpush2.bf16.msra.mxu0 0
  %1193 = vmatprep.subr.bf16.mxu0 0
  %1194 = vmatpush2.bf16.msra.mxu0 0
  %1195 = vmatprep.subr.bf16.mxu0 0
  %1196 = vmatpush2.bf16.msra.mxu0 0
  %1197 = vmatprep.subr.bf16.mxu0 0
  %1198 = vmatpush2.bf16.msra.mxu0 0
  %1199 = vmatprep.subr.bf16.mxu0 0
  %1200 = vmatpush2.bf16.msra.mxu0 0
  %1201 = vmatprep.mubr.bf16.mxu0 0
  %1202 = vmatmul.mubr.bf16.gmra.mxu0 %v1146
  %v1203 = vpop.f32.mrf.mxu0
  %v1204 = vadd.f32 0.0, %v1203
  %v1205 = vpop.f32.mrf.mxu0
  %v1206 = vpop.f32.mrf.mxu0
  %v1207 = vadd.f32 0.0, %v1206
  %v1208 = vpop.f32.mrf.mxu0
  %1209 = vmatprep.mubr.bf16.mxu0 0
  %1210 = vmatmul.mubr.bf16.gmra.mxu0 %v1149
  %v1211 = vpop.f32.mrf.mxu0
  %v1212 = vadd.f32 0.0, %v1211
  %v1213 = vpop.f32.mrf.mxu0
  %v1214 = vpop.f32.mrf.mxu0
  %v1215 = vadd.f32 0.0, %v1214
  %v1216 = vpop.f32.mrf.mxu0
  %1217 = vmatprep.mubr.bf16.mxu0 0
  %1218 = vmatmul.mubr.bf16.gmra.mxu0 %v1152
  %v1219 = vpop.f32.mrf.mxu0
  %v1220 = vadd.f32 0.0, %v1219
  %v1221 = vpop.f32.mrf.mxu0
  %v1222 = vpop.f32.mrf.mxu0
  %v1223 = vadd.f32 0.0, %v1222
  %v1224 = vpop.f32.mrf.mxu0
  %1225 = vmatprep.mubr.bf16.mxu0 0
  %1226 = vmatmul.mubr.bf16.gmra.mxu0 %v1155
  %v1227 = vpop.f32.mrf.mxu0
  %v1228 = vadd.f32 0.0, %v1227
  %v1229 = vpop.f32.mrf.mxu0
  %v1230 = vpop.f32.mrf.mxu0
  %v1231 = vadd.f32 0.0, %v1230
  %v1232 = vpop.f32.mrf.mxu0
  %1233 = vmatprep.mubr.bf16.mxu0 0
  %1234 = vmatmul.mubr.bf16.gmra.mxu0 %v1158
  %v1235 = vpop.f32.mrf.mxu0
  %v1236 = vadd.f32 0.0, %v1235
  %v1237 = vpop.f32.mrf.mxu0
  %v1238 = vpop.f32.mrf.mxu0
  %v1239 = vadd.f32 0.0, %v1238
  %v1240 = vpop.f32.mrf.mxu0
  %1241 = vmatprep.mubr.bf16.mxu0 0
  %1242 = vmatmul.mubr.bf16.gmra.mxu0 %v1161
  %v1243 = vpop.f32.mrf.mxu0
  %v1244 = vadd.f32 0.0, %v1243
  %v1245 = vpop.f32.mrf.mxu0
  %v1246 = vpop.f32.mrf.mxu0
  %v1247 = vadd.f32 0.0, %v1246
  %v1248 = vpop.f32.mrf.mxu0
  %1249 = vmatprep.mubr.bf16.mxu0 0
  %1250 = vmatmul.mubr.bf16.gmra.mxu0 %v1164
  %v1251 = vpop.f32.mrf.mxu0
  %v1252 = vadd.f32 0.0, %v1251
  %v1253 = vpop.f32.mrf.mxu0
  %v1254 = vpop.f32.mrf.mxu0
  %v1255 = vadd.f32 0.0, %v1254
  %v1256 = vpop.f32.mrf.mxu0
  %1257 = vmatprep.mubr.bf16.mxu0 0
  %1258 = vmatmul.mubr.bf16.gmra.mxu0 %v1167
  %v1259 = vpop.f32.mrf.mxu0
  %v1260 = vadd.f32 0.0, %v1259
  %v1261 = vpop.f32.mrf.mxu0
  %v1262 = vpop.f32.mrf.mxu0
  %v1263 = vadd.f32 0.0, %v1262
  %v1264 = vpop.f32.mrf.mxu0
  %1265 = vdwg.mxu0
  %v1270 = vunpack.c.l.b16 %v1117
  %v1271 = vunpack.c.l.b16 %v1118
  %v1272 = vunpack.c.l.b16 %v1119
  %v1273 = vunpack.c.l.b16 %v1120
  %v1274 = vpack.c.b16 %v1271, %v1270
  %v1275 = vpack.c.b16 %v1273, %v1272
  %v1279 = vsel %vm292, %v1012, 0
  %v1282 = vsel %vm292, %v1013, 0
  %v1285 = vsel %vm292, %v1014, 0
  %v1288 = vsel %vm292, %v1015, 0
  %v1291 = vsel %vm292, %v1016, 0
  %v1294 = vsel %vm292, %v1017, 0
  %v1297 = vsel %vm292, %v1018, 0
  %v1300 = vsel %vm292, %v1019, 0
  %1302 = vmatprep.subr.bf16.mxu0 0
  %1303 = vmatpush1.bf16.msra.mxu0 0
  %1304 = vmatprep.subr.bf16.mxu0 0
  %1305 = vmatpush1.bf16.msra.mxu0 0
  %1306 = vmatprep.subr.bf16.mxu0 0
  %1307 = vmatpush1.bf16.msra.mxu0 0
  %1308 = vmatprep.subr.bf16.mxu0 0
  %1309 = vmatpush1.bf16.msra.mxu0 0
  %1310 = vmatprep.subr.bf16.mxu0 0
  %1311 = vmatpush1.bf16.msra.mxu0 0
  %1312 = vmatprep.subr.bf16.mxu0 0
  %1313 = vmatpush1.bf16.msra.mxu0 0
  %1314 = vmatprep.subr.bf16.mxu0 0
  %1315 = vmatpush1.bf16.msra.mxu0 %v1275
  %1316 = vmatprep.subr.bf16.mxu0 0
  %1317 = vmatpush1.bf16.msra.mxu0 %v1274
  %1318 = vmatprep.subr.bf16.mxu0 0
  %1319 = vmatpush2.bf16.msra.mxu0 0
  %1320 = vmatprep.subr.bf16.mxu0 0
  %1321 = vmatpush2.bf16.msra.mxu0 0
  %1322 = vmatprep.subr.bf16.mxu0 0
  %1323 = vmatpush2.bf16.msra.mxu0 0
  %1324 = vmatprep.subr.bf16.mxu0 0
  %1325 = vmatpush2.bf16.msra.mxu0 0
  %1326 = vmatprep.subr.bf16.mxu0 0
  %1327 = vmatpush2.bf16.msra.mxu0 0
  %1328 = vmatprep.subr.bf16.mxu0 0
  %1329 = vmatpush2.bf16.msra.mxu0 0
  %1330 = vmatprep.subr.bf16.mxu0 0
  %1331 = vmatpush2.bf16.msra.mxu0 0
  %1332 = vmatprep.subr.bf16.mxu0 0
  %1333 = vmatpush2.bf16.msra.mxu0 0
  %1334 = vmatprep.mubr.bf16.mxu0 0
  %1335 = vmatmul.mubr.bf16.gmra.mxu0 %v1279
  %v1336 = vpop.f32.mrf.mxu0
  %v1337 = vadd.f32 %v1204, %v1336
  %v1338 = vpop.f32.mrf.mxu0
  %v1339 = vpop.f32.mrf.mxu0
  %v1340 = vadd.f32 %v1207, %v1339
  %v1341 = vpop.f32.mrf.mxu0
  %1342 = vmatprep.mubr.bf16.mxu0 0
  %1343 = vmatmul.mubr.bf16.gmra.mxu0 %v1282
  %v1344 = vpop.f32.mrf.mxu0
  %v1345 = vadd.f32 %v1212, %v1344
  %v1346 = vpop.f32.mrf.mxu0
  %v1347 = vpop.f32.mrf.mxu0
  %v1348 = vadd.f32 %v1215, %v1347
  %v1349 = vpop.f32.mrf.mxu0
  %1350 = vmatprep.mubr.bf16.mxu0 0
  %1351 = vmatmul.mubr.bf16.gmra.mxu0 %v1285
  %v1352 = vpop.f32.mrf.mxu0
  %v1353 = vadd.f32 %v1220, %v1352
  %v1354 = vpop.f32.mrf.mxu0
  %v1355 = vpop.f32.mrf.mxu0
  %v1356 = vadd.f32 %v1223, %v1355
  %v1357 = vpop.f32.mrf.mxu0
  %1358 = vmatprep.mubr.bf16.mxu0 0
  %1359 = vmatmul.mubr.bf16.gmra.mxu0 %v1288
  %v1360 = vpop.f32.mrf.mxu0
  %v1361 = vadd.f32 %v1228, %v1360
  %v1362 = vpop.f32.mrf.mxu0
  %v1363 = vpop.f32.mrf.mxu0
  %v1364 = vadd.f32 %v1231, %v1363
  %v1365 = vpop.f32.mrf.mxu0
  %1366 = vmatprep.mubr.bf16.mxu0 0
  %1367 = vmatmul.mubr.bf16.gmra.mxu0 %v1291
  %v1368 = vpop.f32.mrf.mxu0
  %v1369 = vadd.f32 %v1236, %v1368
  %v1370 = vpop.f32.mrf.mxu0
  %v1371 = vpop.f32.mrf.mxu0
  %v1372 = vadd.f32 %v1239, %v1371
  %v1373 = vpop.f32.mrf.mxu0
  %1374 = vmatprep.mubr.bf16.mxu0 0
  %1375 = vmatmul.mubr.bf16.gmra.mxu0 %v1294
  %v1376 = vpop.f32.mrf.mxu0
  %v1377 = vadd.f32 %v1244, %v1376
  %v1378 = vpop.f32.mrf.mxu0
  %v1379 = vpop.f32.mrf.mxu0
  %v1380 = vadd.f32 %v1247, %v1379
  %v1381 = vpop.f32.mrf.mxu0
  %1382 = vmatprep.mubr.bf16.mxu0 0
  %1383 = vmatmul.mubr.bf16.gmra.mxu0 %v1297
  %v1384 = vpop.f32.mrf.mxu0
  %v1385 = vadd.f32 %v1252, %v1384
  %v1386 = vpop.f32.mrf.mxu0
  %v1387 = vpop.f32.mrf.mxu0
  %v1388 = vadd.f32 %v1255, %v1387
  %v1389 = vpop.f32.mrf.mxu0
  %1390 = vmatprep.mubr.bf16.mxu0 0
  %1391 = vmatmul.mubr.bf16.gmra.mxu0 %v1300
  %v1392 = vpop.f32.mrf.mxu0
  %v1393 = vadd.f32 %v1260, %v1392
  %v1394 = vpop.f32.mrf.mxu0
  %v1395 = vpop.f32.mrf.mxu0
  %v1396 = vadd.f32 %v1263, %v1395
  %v1397 = vpop.f32.mrf.mxu0
  %1398 = vdwg.mxu0
  %v1399 = vld [vmem:[%s10] sm:$0x1]
  %v1401 = vlaneseq
  %v1402 = vshrl.u32 %v1401, 7
  %v1403 = vsub.s32 0, %v1402
  %v1404 = vrot.slane %v1399, %v1403
  %v1406 = vadd.f32 %v1337, %v1404
  %v1407 = vadd.f32 %v1340, %v1404
  %v1408 = vadd.f32 %v1345, %v1404
  %v1409 = vadd.f32 %v1348, %v1404
  %v1410 = vadd.f32 %v1353, %v1404
  %v1411 = vadd.f32 %v1356, %v1404
  %v1412 = vadd.f32 %v1361, %v1404
  %v1413 = vadd.f32 %v1364, %v1404
  %v1414 = vadd.f32 %v1369, %v1404
  %v1415 = vadd.f32 %v1372, %v1404
  %v1416 = vadd.f32 %v1377, %v1404
  %v1417 = vadd.f32 %v1380, %v1404
  %v1418 = vadd.f32 %v1385, %v1404
  %v1419 = vadd.f32 %v1388, %v1404
  %v1420 = vadd.f32 %v1393, %v1404
  %v1421 = vadd.f32 %v1396, %v1404
  %1422 = vst [vmem:[%s11] sm:$0xff] %v1406
  %1423 = vst [vmem:[%s11 + $0x8] sm:$0xff] %v1407
  %1424 = vst [vmem:[%s11 + $0x10] sm:$0xff] %v1408
  %1425 = vst [vmem:[%s11 + $0x18] sm:$0xff] %v1409
  %1426 = vst [vmem:[%s11 + $0x20] sm:$0xff] %v1410
  %1427 = vst [vmem:[%s11 + $0x28] sm:$0xff] %v1411
  %1428 = vst [vmem:[%s11 + $0x30] sm:$0xff] %v1412
  %1429 = vst [vmem:[%s11 + $0x38] sm:$0xff] %v1413
  %1430 = vst [vmem:[%s11 + $0x40] sm:$0xff] %v1414
  %1431 = vst [vmem:[%s11 + $0x48] sm:$0xff] %v1415
  %1432 = vst [vmem:[%s11 + $0x50] sm:$0xff] %v1416
  %1433 = vst [vmem:[%s11 + $0x58] sm:$0xff] %v1417
  %1434 = vst [vmem:[%s11 + $0x60] sm:$0xff] %v1418
  %1435 = vst [vmem:[%s11 + $0x68] sm:$0xff] %v1419
  %1436 = vst [vmem:[%s11 + $0x70] sm:$0xff] %v1420
  %1437 = vst [vmem:[%s11 + $0x78] sm:$0xff] %v1421
  // Predicated region
  $region46: #{_gnn_forward_impl.1} parent=0 // pred_check
    _
  $region47: #{_gnn_forward_impl.1} parent=0 // pred_check_branch
    %1439 = sbr.rel (0) target = $region49
  $region48: #{_gnn_forward_impl.1} parent=0 // pred_region
    _
  $region49: #{_gnn_forward_impl.1} parent=0 // pred_fallthru
    _
  // Predicated region
  $region50: #{_gnn_forward_impl.1} parent=0 // pred_check
    _
  $region51: #{_gnn_forward_impl.1} parent=0 // pred_check_branch
    %1441 = sbr.rel (0) target = $region53
  $region52: #{_gnn_forward_impl.1} parent=0 // pred_region
    _
  $region53: #{_gnn_forward_impl.1} parent=0 // pred_fallthru
    _

</llo_original>
